<compile_context>
chip_gen: v5e
topology: v5e:2x2
jax: 0.10.0
libtpu: 0.0.40
codegen_flags: <defaults>
</compile_context>

<pallas_src>
import functools

import jax
import jax.numpy as jnp
from jax.experimental import pallas as pl
from jax.experimental.pallas import tpu as pltpu

LANE = 128                       # lane width (last-dim padding target)
SUB = 16                         # sublane rounding for the bf16-packed batch dim
MAX_TILE_M = 1024                # batch-tile cap before the VMEM budget kicks in
VMEM_BUDGET = 40 * 1024 * 1024   # per-step footprint target (headroom on v7x 64 MiB)


def _round_up(x, m):
    return (x + m - 1) // m * m


def _cdiv(a, b):
    return -(-a // b)


def _pad2(a, rows, cols):
    return jnp.pad(a, ((0, rows - a.shape[0]), (0, cols - a.shape[1])))


# ----------------------------------------------------------------------------
# One-time weight packing (cached by the BLP object, NOT done per forward).
# ----------------------------------------------------------------------------
def pack_blp_params(enc_main, enc_aux, pred, compute_dtype=jnp.bfloat16):
    """Pad to 128 lanes, cast to bf16/f32, and stack encoder branches once."""
    d_in, d_hid = enc_main["w1"].shape
    d_emb = enc_main["w2"].shape[1]
    d_phid = pred["w1"].shape[1]

    din_p = _round_up(d_in, LANE)
    dh_p = _round_up(d_hid, LANE)
    de_p = _round_up(d_emb, LANE)
    dph_p = _round_up(d_phid, LANE)

    def stack_w(key, rows, cols):
        return jnp.stack([_pad2(enc_main[key], rows, cols),
                          _pad2(enc_aux[key], rows, cols)], 0).astype(compute_dtype)

    def stack_b(key, cols):
        return jnp.stack([_pad2(enc_main[key], 1, cols),
                          _pad2(enc_aux[key], 1, cols)], 0).astype(jnp.float32)

    return {
        "ew1": stack_w("w1", din_p, dh_p),                            # [2, din_p, dh_p] bf16
        "eb1": stack_b("b1", dh_p),                                   # [2, 1, dh_p]     f32
        "ew2": stack_w("w2", dh_p, de_p),                             # [2, dh_p, de_p]  bf16
        "eb2": stack_b("b2", de_p),                                   # [2, 1, de_p]     f32
        "pw1": _pad2(pred["w1"], de_p, dph_p).astype(compute_dtype),  # [de_p, dph_p]    bf16
        "pb1": _pad2(pred["b1"], 1, dph_p).astype(jnp.float32),       # [1, dph_p]       f32
        "pw2": _pad2(pred["w2"], dph_p, de_p).astype(compute_dtype),  # [dph_p, de_p]    bf16
        "pb2": _pad2(pred["b2"], 1, de_p).astype(jnp.float32),        # [1, de_p]        f32
    }


# ----------------------------------------------------------------------------
# Fused BLP forward kernel.   Grid = (branch, batch_tile).
#   branch 0: out = predictor(main_encoder(x_main))   (4 matmuls)
#   branch 1: out = aux_encoder(x_aux)                (2 matmuls)
# Encoder params are stacked [2, ...] along the branch axis; predictor params
# are shared (same block for every grid step).
# ----------------------------------------------------------------------------
def _blp_fused_kernel(xm_ref, xa_ref, ew1_ref, eb1_ref, ew2_ref, eb2_ref,
                      pw1_ref, pb1_ref, pw2_ref, pb2_ref, o_ref):
    branch = pl.program_id(0)

    def encode(x):
        # layer 1: relu(x @ W1 + b1)   (f32 accumulate on the MXU)
        h = jnp.dot(x, ew1_ref[...], preferred_element_type=jnp.float32)
        h = jnp.maximum(h + eb1_ref[...], 0.0)
        # layer 2: embedding = h @ W2 + b2
        e = jnp.dot(h.astype(ew2_ref.dtype), ew2_ref[...],
                    preferred_element_type=jnp.float32)
        return e + eb2_ref[...]

    @pl.when(branch == 0)
    def _():  # main path: predictor runs on the VMEM-resident embedding
        e = encode(xm_ref[...])
        g = jnp.dot(e.astype(pw1_ref.dtype), pw1_ref[...],
                    preferred_element_type=jnp.float32)
        g = jnp.maximum(g + pb1_ref[...], 0.0)
        p = jnp.dot(g.astype(pw2_ref.dtype), pw2_ref[...],
                    preferred_element_type=jnp.float32)
        o_ref[...] = (p + pb2_ref[...]).astype(o_ref.dtype)

    @pl.when(branch != 0)
    def _():  # aux path: the embedding itself is the output
        o_ref[...] = encode(xa_ref[...]).astype(o_ref.dtype)


# ----------------------------------------------------------------------------
# VMEM budgeting / tile selection
# ----------------------------------------------------------------------------
def _vmem_estimate(tile_m, din_p, dh_p, de_p, dph_p, w_bufs, in_bytes, out_bytes):
    x_io = 2 * 2 * tile_m * din_p * in_bytes            # xm + xa, double-buffered
    out = 2 * tile_m * de_p * out_bytes                 # double-buffered output
    wts = w_bufs * 2 * (din_p * dh_p + dh_p * de_p + de_p * dph_p + dph_p * de_p)
    bias = w_bufs * 4 * (dh_p + dph_p + 2 * de_p)
    tmp = 4 * tile_m * (dh_p + 2 * de_p + dph_p)        # f32 h / e / g / p temporaries
    return x_io + out + wts + bias + tmp


def _pick_tile_m(n, din_p, dh_p, de_p, dph_p, w_bufs, in_bytes, out_bytes,
                 max_tile_m):
    cap = max(SUB, (max_tile_m // SUB) * SUB)
    while cap > SUB and _vmem_estimate(cap, din_p, dh_p, de_p, dph_p, w_bufs,
                                       in_bytes, out_bytes) > VMEM_BUDGET:
        cap -= SUB
    # Spread n evenly over ceil(n / cap) tiles so we never add a nearly-empty
    # trailing tile (e.g. n=520 -> 2 x 272 rows, not 512 + mostly-padding 512).
    num_tiles = _cdiv(n, cap)
    return min(cap, _round_up(_cdiv(n, num_tiles), SUB))


# ----------------------------------------------------------------------------
# Forward wrapper: inputs (gated pad/cast) + one pallas_call, no weight copies.
# ----------------------------------------------------------------------------
@functools.partial(
    jax.jit,
    static_argnames=("d_emb", "out_dtype", "max_tile_m", "single_buffer_weights"))
def blp_forward_pallas(main_x, aux_x, packed, *, d_emb,
                       out_dtype=jnp.bfloat16, max_tile_m=MAX_TILE_M,
                       single_buffer_weights=True):
    n, d_in = main_x.shape
    compute_dtype = packed["ew1"].dtype
    din_p, dh_p = packed["ew1"].shape[1:]
    de_p = packed["ew2"].shape[2]
    dph_p = packed["pw1"].shape[1]

    in_bytes = jnp.dtype(compute_dtype).itemsize
    out_bytes = jnp.dtype(out_dtype).itemsize
    w_bufs = 1 if single_buffer_weights else 2

    tile_m = _pick_tile_m(n, din_p, dh_p, de_p, dph_p, w_bufs,
                          in_bytes, out_bytes, max_tile_m)
    n_p = _round_up(n, tile_m)
    grid = (2, n_p // tile_m)

    def prep(x):
        # Skip the pad/cast copy entirely when the caller already provides
        # lane-aligned bf16 inputs.
        if x.dtype != compute_dtype:
            x = x.astype(compute_dtype)
        if x.shape != (n_p, din_p):
            x = jnp.pad(x, ((0, n_p - n), (0, din_p - d_in)))
        return x

    xm = prep(main_x)
    xa = prep(aux_x)

    weight_mode = pl.Buffered(1) if single_buffer_weights else None

    def wspec(shape, index_map):
        if weight_mode is None:
            return pl.BlockSpec(shape, index_map)
        return pl.BlockSpec(shape, index_map, pipeline_mode=weight_mode)

    vmem_limit = max(
        16 << 20,
        min(int(1.5 * _vmem_estimate(tile_m, din_p, dh_p, de_p, dph_p, w_bufs,
                                     in_bytes, out_bytes)) + (2 << 20),
            64 << 20))

    out = pl.pallas_call(
        _blp_fused_kernel,
        out_shape=jax.ShapeDtypeStruct((2, n_p, de_p), out_dtype),
        grid_spec=pltpu.PrefetchScalarGridSpec(
            num_scalar_prefetch=0,
            grid=grid,
            in_specs=[
                # main input: real batch tile on branch 0; pinned to block 0
                # (hence not re-fetched) on branch 1.
                pl.BlockSpec((tile_m, din_p), lambda b, m: (m * (1 - b), 0)),
                # aux input: mirror of the above.
                pl.BlockSpec((tile_m, din_p), lambda b, m: (m * b, 0)),
                # encoder params: branch-indexed, resident across batch tiles.
                wspec((None, din_p, dh_p), lambda b, m: (b, 0, 0)),
                wspec((None, 1, dh_p), lambda b, m: (b, 0, 0)),
                wspec((None, dh_p, de_p), lambda b, m: (b, 0, 0)),
                wspec((None, 1, de_p), lambda b, m: (b, 0, 0)),
                # predictor params: one shared block for every grid step.
                wspec((de_p, dph_p), lambda b, m: (0, 0)),
                wspec((1, dph_p), lambda b, m: (0, 0)),
                wspec((dph_p, de_p), lambda b, m: (0, 0)),
                wspec((1, de_p), lambda b, m: (0, 0)),
            ],
            out_specs=pl.BlockSpec((None, tile_m, de_p), lambda b, m: (b, m, 0)),
        ),
        compiler_params=pltpu.CompilerParams(
            # Balanced batch-tile axis is megacore-parallel; the 2:1-imbalanced
            # branch axis stays the sequential outer loop (weights change only
            # once per branch).
            dimension_semantics=("arbitrary", "parallel"),
            vmem_limit_bytes=vmem_limit),
    )(xm, xa, packed["ew1"], packed["eb1"], packed["ew2"], packed["eb2"],
      packed["pw1"], packed["pb1"], packed["pw2"], packed["pb2"])

    main_p = out[0, :n, :d_emb]
    aux_h = out[1, :n, :d_emb]
    return main_p, aux_h


_SINGLE_BUFFERED_WEIGHTS_OK = True


def _blp_forward(main_x, aux_x, packed, d_emb, out_dtype=jnp.bfloat16):
    """Forward with graceful fallback if this JAX build rejects pl.Buffered."""
    global _SINGLE_BUFFERED_WEIGHTS_OK
    if _SINGLE_BUFFERED_WEIGHTS_OK:
        try:
            return blp_forward_pallas(main_x, aux_x, packed, d_emb=d_emb,
                                      out_dtype=out_dtype,
                                      single_buffer_weights=True)
        except Exception:
            _SINGLE_BUFFERED_WEIGHTS_OK = False
    return blp_forward_pallas(main_x, aux_x, packed, d_emb=d_emb,
                              out_dtype=out_dtype, single_buffer_weights=False)


# ----------------------------------------------------------------------------
# Parameter construction (deterministic, PyTorch-Linear-style init)
# ----------------------------------------------------------------------------
def _linear_params(key, d_in, d_out):
    kw, kb = jax.random.split(key)
    bound = 1.0 / jnp.sqrt(jnp.float32(d_in))
    w = jax.random.uniform(kw, (d_in, d_out), jnp.float32, -bound, bound)
    b = jax.random.uniform(kb, (1, d_out), jnp.float32, -bound, bound)
    return w, b


def make_mlp2_params(key, d_in, d_hidden, d_out):
    k1, k2 = jax.random.split(key)
    w1, b1 = _linear_params(k1, d_in, d_hidden)
    w2, b2 = _linear_params(k2, d_hidden, d_out)
    return {"w1": w1, "b1": b1, "w2": w2, "b2": b2}


# ----------------------------------------------------------------------------
# BLP module (forward only)
# ----------------------------------------------------------------------------
class BLP:
    def __init__(self, key, d_in, d_enc_hidden, d_embed, d_pred_hidden,
                 compute_dtype=jnp.bfloat16, out_dtype=jnp.bfloat16):
        k_enc, k_pred, k_aux = jax.random.split(key, 3)
        self.main_encoder = make_mlp2_params(k_enc, d_in, d_enc_hidden, d_embed)
        self.mlp_predictor = make_mlp2_params(k_pred, d_embed, d_pred_hidden, d_embed)
        # aux encoder: deepcopy + reset_parameters() -> fresh independent init;
        # frozen (no grads are taken here anyway).
        self.aux_encoder = make_mlp2_params(k_aux, d_in, d_enc_hidden, d_embed)
        self.d_embed = d_embed
        self.compute_dtype = compute_dtype
        self.out_dtype = out_dtype
        self._refresh_packed()

    def _refresh_packed(self):
        # Cached padded/bf16/branch-stacked weights, reused across forwards.
        self._packed = pack_blp_params(self.main_encoder, self.aux_encoder,
                                       self.mlp_predictor, self.compute_dtype)

    def set_main_params(self, encoder=None, predictor=None):
        # TODO(synk): autograd/training is out of scope for this forward-only
        # kernel; call this after any main-param change to keep the cache in sync.
        if encoder is not None:
            self.main_encoder = encoder
        if predictor is not None:
            self.mlp_predictor = predictor
        self._refresh_packed()

    def update_aux_network(self, tau):
        # param_k = tau * param_k + (1 - tau) * param_q
        self.aux_encoder = jax.tree_util.tree_map(
            lambda pk, pq: tau * pk + (1.0 - tau) * pq,
            self.aux_encoder, self.main_encoder)
        self._refresh_packed()

    def __call__(self, main_x, aux_x):
        main_p, aux_h = _blp_forward(main_x, aux_x, self._packed, self.d_embed,
                                     out_dtype=self.out_dtype)
        return main_p, jax.lax.stop_gradient(aux_h)


# ----------------------------------------------------------------------------
# Plain-JAX reference (same bf16-operand / f32-accumulate path as the kernel)
# ----------------------------------------------------------------------------
def _mlp2_ref_bf16(params, x):
    xb = x.astype(jnp.bfloat16)
    w1 = params["w1"].astype(jnp.bfloat16)
    w2 = params["w2"].astype(jnp.bfloat16)
    h = jnp.dot(xb, w1, preferred_element_type=jnp.float32) + params["b1"]
    h = jnp.maximum(h, 0.0)
    return jnp.dot(h.astype(jnp.bfloat16), w2,
                   preferred_element_type=jnp.float32) + params["b2"]


if __name__ == "__main__":
    # Small shapes consistent with the forward: batch=8, feat=32,
    # encoder hidden=64, embedding=32, predictor hidden=64.
    N, D_IN, D_HID, D_EMB, D_PRED_HID = 8, 32, 64, 32, 64

    key = jax.random.PRNGKey(0)
    k_model, k_main, k_aux = jax.random.split(key, 3)

    model = BLP(k_model, D_IN, D_HID, D_EMB, D_PRED_HID)

    main_x = jax.random.normal(k_main, (N, D_IN), jnp.float32)
    aux_x = jax.random.normal(k_aux, (N, D_IN), jnp.float32)

    main_p, aux_h = model(main_x, aux_x)
    jax.block_until_ready((main_p, aux_h))

    ref_main_h = _mlp2_ref_bf16(model.main_encoder, main_x)
    ref_main_p = _mlp2_ref_bf16(model.mlp_predictor, ref_main_h)
    ref_aux_h = _mlp2_ref_bf16(model.aux_encoder, aux_x)

    assert main_p.shape == (N, D_EMB) and aux_h.shape == (N, D_EMB)
    mp = main_p.astype(jnp.float32)
    ah = aux_h.astype(jnp.float32)
    assert jnp.allclose(mp, ref_main_p, atol=2e-2, rtol=2e-2), (
        "main_p mismatch: max abs err "
        f"{float(jnp.max(jnp.abs(mp - ref_main_p)))}")
    assert jnp.allclose(ah, ref_aux_h, atol=2e-2, rtol=2e-2), (
        "aux_h mismatch: max abs err "
        f"{float(jnp.max(jnp.abs(ah - ref_aux_h)))}")

    # Exercise the cached-weight invalidation path (EMA update) once.
    model.update_aux_network(0.99)
    main_p2, aux_h2 = model(main_x, aux_x)
    jax.block_until_ready((main_p2, aux_h2))
    assert bool(jnp.all(jnp.isfinite(main_p2))) and bool(jnp.all(jnp.isfinite(aux_h2)))

    print("KERNEL_OK")
</pallas_src>

<mosaic_0001>
module attributes {stable_mosaic.version = 11 : i64} {
  func.func @_blp_fused_kernel(%arg0: i32, %arg1: i32, %arg2: memref<16x128xbf16, #tpu.memory_space<vmem>>, %arg3: memref<16x128xbf16, #tpu.memory_space<vmem>>, %arg4: memref<1x128x128xbf16, #tpu.memory_space<vmem>>, %arg5: memref<1x1x128xf32, #tpu.memory_space<vmem>>, %arg6: memref<1x128x128xbf16, #tpu.memory_space<vmem>>, %arg7: memref<1x1x128xf32, #tpu.memory_space<vmem>>, %arg8: memref<128x128xbf16, #tpu.memory_space<vmem>>, %arg9: memref<1x128xf32, #tpu.memory_space<vmem>>, %arg10: memref<128x128xbf16, #tpu.memory_space<vmem>>, %arg11: memref<1x128xf32, #tpu.memory_space<vmem>>, %arg12: memref<1x16x128xbf16, #tpu.memory_space<vmem>>) attributes {dimension_semantics = [#tpu.dimension_semantics<arbitrary>, #tpu.dimension_semantics<parallel>], iteration_bounds = array<i64: 2, 1>, scalar_prefetch = 0 : i64, scratch_operands = 0 : i64, tpu.core_type = #tpu.core_type<tc>, window_params = [{transform_indices = @transform_0, window_bounds = array<i64: 16, 128>}, {transform_indices = @transform_1, window_bounds = array<i64: 16, 128>}, {pipeline_mode = #tpu.pipeline_mode<synchronous>, transform_indices = @transform_2, window_bounds = array<i64: 1, 128, 128>}, {pipeline_mode = #tpu.pipeline_mode<synchronous>, transform_indices = @transform_3, window_bounds = array<i64: 1, 1, 128>}, {pipeline_mode = #tpu.pipeline_mode<synchronous>, transform_indices = @transform_4, window_bounds = array<i64: 1, 128, 128>}, {pipeline_mode = #tpu.pipeline_mode<synchronous>, transform_indices = @transform_5, window_bounds = array<i64: 1, 1, 128>}, {pipeline_mode = #tpu.pipeline_mode<synchronous>, transform_indices = @transform_6, window_bounds = array<i64: 128, 128>}, {pipeline_mode = #tpu.pipeline_mode<synchronous>, transform_indices = @transform_7, window_bounds = array<i64: 1, 128>}, {pipeline_mode = #tpu.pipeline_mode<synchronous>, transform_indices = @transform_8, window_bounds = array<i64: 128, 128>}, {pipeline_mode = #tpu.pipeline_mode<synchronous>, transform_indices = @transform_9, window_bounds = array<i64: 1, 128>}, {transform_indices = @transform_10, window_bounds = array<i64: 1, 16, 128>}]} {
    %c0_i32 = arith.constant 0 : i32
    %0 = arith.cmpi eq, %arg0, %c0_i32 : i32
    %1 = arith.extui %0 : i1 to i32
    %c0_i32_0 = arith.constant 0 : i32
    %2 = arith.cmpi ne, %1, %c0_i32_0 : i32
    scf.if %2 {
      %c0 = arith.constant 0 : index
      %c0_3 = arith.constant 0 : index
      %6 = vector.load %arg2[%c0, %c0_3] : memref<16x128xbf16, #tpu.memory_space<vmem>>, vector<16x128xbf16>
      %c0_4 = arith.constant 0 : index
      %c0_5 = arith.constant 0 : index
      %c0_6 = arith.constant 0 : index
      %7 = vector.load %arg4[%c0_4, %c0_5, %c0_6] : memref<1x128x128xbf16, #tpu.memory_space<vmem>>, vector<1x128x128xbf16>
      %8 = vector.shape_cast %7 : vector<1x128x128xbf16> to vector<128x128xbf16>
      %cst = arith.constant dense<0.000000e+00> : vector<16x128xf32>
      %9 = tpu.matmul %6, %8, %cst {dimension_numbers = #tpu.dot_dimension_numbers<[1], [0], [0], [1], [0, 0, 1, 1], [], []>} : vector<16x128xbf16>, vector<128x128xbf16>, vector<16x128xf32> -> vector<16x128xf32>
      %c0_7 = arith.constant 0 : index
      %c0_8 = arith.constant 0 : index
      %c0_9 = arith.constant 0 : index
      %10 = vector.load %arg5[%c0_7, %c0_8, %c0_9] : memref<1x1x128xf32, #tpu.memory_space<vmem>>, vector<1x1x128xf32>
      %11 = vector.shape_cast %10 : vector<1x1x128xf32> to vector<1x128xf32>
      %12 = vector.broadcast %11 : vector<1x128xf32> to vector<16x128xf32>
      %13 = arith.addf %9, %12 : vector<16x128xf32>
      %cst_10 = arith.constant 0.000000e+00 : f32
      %14 = vector.broadcast %cst_10 : f32 to vector<16x128xf32>
      %15 = arith.maximumf %13, %14 : vector<16x128xf32>
      %16 = arith.truncf %15 : vector<16x128xf32> to vector<16x128xbf16>
      %c0_11 = arith.constant 0 : index
      %c0_12 = arith.constant 0 : index
      %c0_13 = arith.constant 0 : index
      %17 = vector.load %arg6[%c0_11, %c0_12, %c0_13] : memref<1x128x128xbf16, #tpu.memory_space<vmem>>, vector<1x128x128xbf16>
      %18 = vector.shape_cast %17 : vector<1x128x128xbf16> to vector<128x128xbf16>
      %cst_14 = arith.constant dense<0.000000e+00> : vector<16x128xf32>
      %19 = tpu.matmul %16, %18, %cst_14 {dimension_numbers = #tpu.dot_dimension_numbers<[1], [0], [0], [1], [0, 0, 1, 1], [], []>} : vector<16x128xbf16>, vector<128x128xbf16>, vector<16x128xf32> -> vector<16x128xf32>
      %c0_15 = arith.constant 0 : index
      %c0_16 = arith.constant 0 : index
      %c0_17 = arith.constant 0 : index
      %20 = vector.load %arg7[%c0_15, %c0_16, %c0_17] : memref<1x1x128xf32, #tpu.memory_space<vmem>>, vector<1x1x128xf32>
      %21 = vector.shape_cast %20 : vector<1x1x128xf32> to vector<1x128xf32>
      %22 = vector.broadcast %21 : vector<1x128xf32> to vector<16x128xf32>
      %23 = arith.addf %19, %22 : vector<16x128xf32>
      %24 = arith.truncf %23 : vector<16x128xf32> to vector<16x128xbf16>
      %c0_18 = arith.constant 0 : index
      %c0_19 = arith.constant 0 : index
      %25 = vector.load %arg8[%c0_18, %c0_19] : memref<128x128xbf16, #tpu.memory_space<vmem>>, vector<128x128xbf16>
      %cst_20 = arith.constant dense<0.000000e+00> : vector<16x128xf32>
      %26 = tpu.matmul %24, %25, %cst_20 {dimension_numbers = #tpu.dot_dimension_numbers<[1], [0], [0], [1], [0, 0, 1, 1], [], []>} : vector<16x128xbf16>, vector<128x128xbf16>, vector<16x128xf32> -> vector<16x128xf32>
      %c0_21 = arith.constant 0 : index
      %c0_22 = arith.constant 0 : index
      %27 = vector.load %arg9[%c0_21, %c0_22] : memref<1x128xf32, #tpu.memory_space<vmem>>, vector<1x128xf32>
      %28 = vector.broadcast %27 : vector<1x128xf32> to vector<16x128xf32>
      %29 = arith.addf %26, %28 : vector<16x128xf32>
      %cst_23 = arith.constant 0.000000e+00 : f32
      %30 = vector.broadcast %cst_23 : f32 to vector<16x128xf32>
      %31 = arith.maximumf %29, %30 : vector<16x128xf32>
      %32 = arith.truncf %31 : vector<16x128xf32> to vector<16x128xbf16>
      %c0_24 = arith.constant 0 : index
      %c0_25 = arith.constant 0 : index
      %33 = vector.load %arg10[%c0_24, %c0_25] : memref<128x128xbf16, #tpu.memory_space<vmem>>, vector<128x128xbf16>
      %cst_26 = arith.constant dense<0.000000e+00> : vector<16x128xf32>
      %34 = tpu.matmul %32, %33, %cst_26 {dimension_numbers = #tpu.dot_dimension_numbers<[1], [0], [0], [1], [0, 0, 1, 1], [], []>} : vector<16x128xbf16>, vector<128x128xbf16>, vector<16x128xf32> -> vector<16x128xf32>
      %c0_27 = arith.constant 0 : index
      %c0_28 = arith.constant 0 : index
      %35 = vector.load %arg11[%c0_27, %c0_28] : memref<1x128xf32, #tpu.memory_space<vmem>>, vector<1x128xf32>
      %36 = vector.broadcast %35 : vector<1x128xf32> to vector<16x128xf32>
      %37 = arith.addf %34, %36 : vector<16x128xf32>
      %38 = arith.truncf %37 : vector<16x128xf32> to vector<16x128xbf16>
      %c0_29 = arith.constant 0 : index
      %c0_30 = arith.constant 0 : index
      %c0_31 = arith.constant 0 : index
      %39 = vector.load %arg12[%c0_29, %c0_30, %c0_31] : memref<1x16x128xbf16, #tpu.memory_space<vmem>>, vector<1x16x128xbf16>
      %40 = vector.shape_cast %39 : vector<1x16x128xbf16> to vector<16x128xbf16>
      %41 = vector.shape_cast %38 : vector<16x128xbf16> to vector<1x16x128xbf16>
      tpu.vector_store %arg12[%c0_29, %c0_30, %c0_31], %41 {strides = array<i32>} : memref<1x16x128xbf16, #tpu.memory_space<vmem>>, vector<1x16x128xbf16>,
    } else {
    }
    %c0_i32_1 = arith.constant 0 : i32
    %3 = arith.cmpi ne, %arg0, %c0_i32_1 : i32
    %4 = arith.extui %3 : i1 to i32
    %c0_i32_2 = arith.constant 0 : i32
    %5 = arith.cmpi ne, %4, %c0_i32_2 : i32
    scf.if %5 {
      %c0 = arith.constant 0 : index
      %c0_3 = arith.constant 0 : index
      %6 = vector.load %arg3[%c0, %c0_3] : memref<16x128xbf16, #tpu.memory_space<vmem>>, vector<16x128xbf16>
      %c0_4 = arith.constant 0 : index
      %c0_5 = arith.constant 0 : index
      %c0_6 = arith.constant 0 : index
      %7 = vector.load %arg4[%c0_4, %c0_5, %c0_6] : memref<1x128x128xbf16, #tpu.memory_space<vmem>>, vector<1x128x128xbf16>
      %8 = vector.shape_cast %7 : vector<1x128x128xbf16> to vector<128x128xbf16>
      %cst = arith.constant dense<0.000000e+00> : vector<16x128xf32>
      %9 = tpu.matmul %6, %8, %cst {dimension_numbers = #tpu.dot_dimension_numbers<[1], [0], [0], [1], [0, 0, 1, 1], [], []>} : vector<16x128xbf16>, vector<128x128xbf16>, vector<16x128xf32> -> vector<16x128xf32>
      %c0_7 = arith.constant 0 : index
      %c0_8 = arith.constant 0 : index
      %c0_9 = arith.constant 0 : index
      %10 = vector.load %arg5[%c0_7, %c0_8, %c0_9] : memref<1x1x128xf32, #tpu.memory_space<vmem>>, vector<1x1x128xf32>
      %11 = vector.shape_cast %10 : vector<1x1x128xf32> to vector<1x128xf32>
      %12 = vector.broadcast %11 : vector<1x128xf32> to vector<16x128xf32>
      %13 = arith.addf %9, %12 : vector<16x128xf32>
      %cst_10 = arith.constant 0.000000e+00 : f32
      %14 = vector.broadcast %cst_10 : f32 to vector<16x128xf32>
      %15 = arith.maximumf %13, %14 : vector<16x128xf32>
      %16 = arith.truncf %15 : vector<16x128xf32> to vector<16x128xbf16>
      %c0_11 = arith.constant 0 : index
      %c0_12 = arith.constant 0 : index
      %c0_13 = arith.constant 0 : index
      %17 = vector.load %arg6[%c0_11, %c0_12, %c0_13] : memref<1x128x128xbf16, #tpu.memory_space<vmem>>, vector<1x128x128xbf16>
      %18 = vector.shape_cast %17 : vector<1x128x128xbf16> to vector<128x128xbf16>
      %cst_14 = arith.constant dense<0.000000e+00> : vector<16x128xf32>
      %19 = tpu.matmul %16, %18, %cst_14 {dimension_numbers = #tpu.dot_dimension_numbers<[1], [0], [0], [1], [0, 0, 1, 1], [], []>} : vector<16x128xbf16>, vector<128x128xbf16>, vector<16x128xf32> -> vector<16x128xf32>
      %c0_15 = arith.constant 0 : index
      %c0_16 = arith.constant 0 : index
      %c0_17 = arith.constant 0 : index
      %20 = vector.load %arg7[%c0_15, %c0_16, %c0_17] : memref<1x1x128xf32, #tpu.memory_space<vmem>>, vector<1x1x128xf32>
      %21 = vector.shape_cast %20 : vector<1x1x128xf32> to vector<1x128xf32>
      %22 = vector.broadcast %21 : vector<1x128xf32> to vector<16x128xf32>
      %23 = arith.addf %19, %22 : vector<16x128xf32>
      %24 = arith.truncf %23 : vector<16x128xf32> to vector<16x128xbf16>
      %c0_18 = arith.constant 0 : index
      %c0_19 = arith.constant 0 : index
      %c0_20 = arith.constant 0 : index
      %25 = vector.load %arg12[%c0_18, %c0_19, %c0_20] : memref<1x16x128xbf16, #tpu.memory_space<vmem>>, vector<1x16x128xbf16>
      %26 = vector.shape_cast %25 : vector<1x16x128xbf16> to vector<16x128xbf16>
      %27 = vector.shape_cast %24 : vector<16x128xbf16> to vector<1x16x128xbf16>
      tpu.vector_store %arg12[%c0_18, %c0_19, %c0_20], %27 {strides = array<i32>} : memref<1x16x128xbf16, #tpu.memory_space<vmem>>, vector<1x16x128xbf16>,
    } else {
    }
    return
  }
  func.func @transform_0(%arg0: i32, %arg1: i32) -> (i32, i32) {
    %c1_i32 = arith.constant 1 : i32
    %0 = arith.subi %c1_i32, %arg0 : i32
    %1 = arith.muli %arg1, %0 : i32
    %c0_i32 = arith.constant 0 : i32
    %c0_i32_0 = arith.constant 0 : i32
    return %1, %c0_i32 : i32, i32
  }
  func.func @transform_1(%arg0: i32, %arg1: i32) -> (i32, i32) {
    %0 = arith.muli %arg1, %arg0 : i32
    %c0_i32 = arith.constant 0 : i32
    %c0_i32_0 = arith.constant 0 : i32
    return %0, %c0_i32 : i32, i32
  }
  func.func @transform_2(%arg0: i32, %arg1: i32) -> (i32, i32, i32) {
    %c0_i32 = arith.constant 0 : i32
    %c0_i32_0 = arith.constant 0 : i32
    %c0_i32_1 = arith.constant 0 : i32
    return %arg0, %c0_i32, %c0_i32_0 : i32, i32, i32
  }
  func.func @transform_3(%arg0: i32, %arg1: i32) -> (i32, i32, i32) {
    %c0_i32 = arith.constant 0 : i32
    %c0_i32_0 = arith.constant 0 : i32
    %c0_i32_1 = arith.constant 0 : i32
    return %arg0, %c0_i32, %c0_i32_0 : i32, i32, i32
  }
  func.func @transform_4(%arg0: i32, %arg1: i32) -> (i32, i32, i32) {
    %c0_i32 = arith.constant 0 : i32
    %c0_i32_0 = arith.constant 0 : i32
    %c0_i32_1 = arith.constant 0 : i32
    return %arg0, %c0_i32, %c0_i32_0 : i32, i32, i32
  }
  func.func @transform_5(%arg0: i32, %arg1: i32) -> (i32, i32, i32) {
    %c0_i32 = arith.constant 0 : i32
    %c0_i32_0 = arith.constant 0 : i32
    %c0_i32_1 = arith.constant 0 : i32
    return %arg0, %c0_i32, %c0_i32_0 : i32, i32, i32
  }
  func.func @transform_6(%arg0: i32, %arg1: i32) -> (i32, i32) {
    %c0_i32 = arith.constant 0 : i32
    %c0_i32_0 = arith.constant 0 : i32
    %c0_i32_1 = arith.constant 0 : i32
    return %c0_i32, %c0_i32_0 : i32, i32
  }
  func.func @transform_7(%arg0: i32, %arg1: i32) -> (i32, i32) {
    %c0_i32 = arith.constant 0 : i32
    %c0_i32_0 = arith.constant 0 : i32
    %c0_i32_1 = arith.constant 0 : i32
    return %c0_i32, %c0_i32_0 : i32, i32
  }
  func.func @transform_8(%arg0: i32, %arg1: i32) -> (i32, i32) {
    %c0_i32 = arith.constant 0 : i32
    %c0_i32_0 = arith.constant 0 : i32
    %c0_i32_1 = arith.constant 0 : i32
    return %c0_i32, %c0_i32_0 : i32, i32
  }
  func.func @transform_9(%arg0: i32, %arg1: i32) -> (i32, i32) {
    %c0_i32 = arith.constant 0 : i32
    %c0_i32_0 = arith.constant 0 : i32
    %c0_i32_1 = arith.constant 0 : i32
    return %c0_i32, %c0_i32_0 : i32, i32
  }
  func.func @transform_10(%arg0: i32, %arg1: i32) -> (i32, i32, i32) {
    %c0_i32 = arith.constant 0 : i32
    %c0_i32_0 = arith.constant 0 : i32
    return %arg0, %arg1, %c0_i32 : i32, i32, i32
  }
}

module attributes {stable_mosaic.version = 11 : i64} {
  func.func @_blp_fused_kernel(%arg0: i32, %arg1: i32, %arg2: memref<16x128xbf16, #tpu.memory_space<vmem>>, %arg3: memref<16x128xbf16, #tpu.memory_space<vmem>>, %arg4: memref<1x128x128xbf16, #tpu.memory_space<vmem>>, %arg5: memref<1x1x128xf32, #tpu.memory_space<vmem>>, %arg6: memref<1x128x128xbf16, #tpu.memory_space<vmem>>, %arg7: memref<1x1x128xf32, #tpu.memory_space<vmem>>, %arg8: memref<128x128xbf16, #tpu.memory_space<vmem>>, %arg9: memref<1x128xf32, #tpu.memory_space<vmem>>, %arg10: memref<128x128xbf16, #tpu.memory_space<vmem>>, %arg11: memref<1x128xf32, #tpu.memory_space<vmem>>, %arg12: memref<1x16x128xbf16, #tpu.memory_space<vmem>>) attributes {dimension_semantics = [#tpu.dimension_semantics<arbitrary>, #tpu.dimension_semantics<parallel>], iteration_bounds = array<i64: 2, 1>, scalar_prefetch = 0 : i64, scratch_operands = 0 : i64, tpu.core_type = #tpu.core_type<tc>, window_params = [{transform_indices = @transform_0, window_bounds = array<i64: 16, 128>}, {transform_indices = @transform_1, window_bounds = array<i64: 16, 128>}, {transform_indices = @transform_2, window_bounds = array<i64: 1, 128, 128>}, {transform_indices = @transform_3, window_bounds = array<i64: 1, 1, 128>}, {transform_indices = @transform_4, window_bounds = array<i64: 1, 128, 128>}, {transform_indices = @transform_5, window_bounds = array<i64: 1, 1, 128>}, {pipeline_mode = #tpu.pipeline_mode<synchronous>, transform_indices = @transform_6, window_bounds = array<i64: 128, 128>}, {pipeline_mode = #tpu.pipeline_mode<synchronous>, transform_indices = @transform_7, window_bounds = array<i64: 1, 128>}, {pipeline_mode = #tpu.pipeline_mode<synchronous>, transform_indices = @transform_8, window_bounds = array<i64: 128, 128>}, {pipeline_mode = #tpu.pipeline_mode<synchronous>, transform_indices = @transform_9, window_bounds = array<i64: 1, 128>}, {transform_indices = @transform_10, window_bounds = array<i64: 1, 16, 128>}]} {
    %c0_i32 = arith.constant 0 : i32
    %0 = arith.cmpi eq, %arg0, %c0_i32 : i32
    %1 = arith.extui %0 : i1 to i32
    %c0_i32_0 = arith.constant 0 : i32
    %2 = arith.cmpi ne, %1, %c0_i32_0 : i32
    scf.if %2 {
      %c0 = arith.constant 0 : index
      %c0_3 = arith.constant 0 : index
      %6 = vector.load %arg2[%c0, %c0_3] : memref<16x128xbf16, #tpu.memory_space<vmem>>, vector<16x128xbf16>
      %c0_4 = arith.constant 0 : index
      %c0_5 = arith.constant 0 : index
      %c0_6 = arith.constant 0 : index
      %7 = vector.load %arg4[%c0_4, %c0_5, %c0_6] : memref<1x128x128xbf16, #tpu.memory_space<vmem>>, vector<1x128x128xbf16>
      %8 = vector.shape_cast %7 : vector<1x128x128xbf16> to vector<128x128xbf16>
      %cst = arith.constant dense<0.000000e+00> : vector<16x128xf32>
      %9 = tpu.matmul %6, %8, %cst {dimension_numbers = #tpu.dot_dimension_numbers<[1], [0], [0], [1], [0, 0, 1, 1], [], []>} : vector<16x128xbf16>, vector<128x128xbf16>, vector<16x128xf32> -> vector<16x128xf32>
      %c0_7 = arith.constant 0 : index
      %c0_8 = arith.constant 0 : index
      %c0_9 = arith.constant 0 : index
      %10 = vector.load %arg5[%c0_7, %c0_8, %c0_9] : memref<1x1x128xf32, #tpu.memory_space<vmem>>, vector<1x1x128xf32>
      %11 = vector.shape_cast %10 : vector<1x1x128xf32> to vector<1x128xf32>
      %12 = vector.broadcast %11 : vector<1x128xf32> to vector<16x128xf32>
      %13 = arith.addf %9, %12 : vector<16x128xf32>
      %cst_10 = arith.constant 0.000000e+00 : f32
      %14 = vector.broadcast %cst_10 : f32 to vector<16x128xf32>
      %15 = arith.maximumf %13, %14 : vector<16x128xf32>
      %16 = arith.truncf %15 : vector<16x128xf32> to vector<16x128xbf16>
      %c0_11 = arith.constant 0 : index
      %c0_12 = arith.constant 0 : index
      %c0_13 = arith.constant 0 : index
      %17 = vector.load %arg6[%c0_11, %c0_12, %c0_13] : memref<1x128x128xbf16, #tpu.memory_space<vmem>>, vector<1x128x128xbf16>
      %18 = vector.shape_cast %17 : vector<1x128x128xbf16> to vector<128x128xbf16>
      %cst_14 = arith.constant dense<0.000000e+00> : vector<16x128xf32>
      %19 = tpu.matmul %16, %18, %cst_14 {dimension_numbers = #tpu.dot_dimension_numbers<[1], [0], [0], [1], [0, 0, 1, 1], [], []>} : vector<16x128xbf16>, vector<128x128xbf16>, vector<16x128xf32> -> vector<16x128xf32>
      %c0_15 = arith.constant 0 : index
      %c0_16 = arith.constant 0 : index
      %c0_17 = arith.constant 0 : index
      %20 = vector.load %arg7[%c0_15, %c0_16, %c0_17] : memref<1x1x128xf32, #tpu.memory_space<vmem>>, vector<1x1x128xf32>
      %21 = vector.shape_cast %20 : vector<1x1x128xf32> to vector<1x128xf32>
      %22 = vector.broadcast %21 : vector<1x128xf32> to vector<16x128xf32>
      %23 = arith.addf %19, %22 : vector<16x128xf32>
      %24 = arith.truncf %23 : vector<16x128xf32> to vector<16x128xbf16>
      %c0_18 = arith.constant 0 : index
      %c0_19 = arith.constant 0 : index
      %25 = vector.load %arg8[%c0_18, %c0_19] : memref<128x128xbf16, #tpu.memory_space<vmem>>, vector<128x128xbf16>
      %cst_20 = arith.constant dense<0.000000e+00> : vector<16x128xf32>
      %26 = tpu.matmul %24, %25, %cst_20 {dimension_numbers = #tpu.dot_dimension_numbers<[1], [0], [0], [1], [0, 0, 1, 1], [], []>} : vector<16x128xbf16>, vector<128x128xbf16>, vector<16x128xf32> -> vector<16x128xf32>
      %c0_21 = arith.constant 0 : index
      %c0_22 = arith.constant 0 : index
      %27 = vector.load %arg9[%c0_21, %c0_22] : memref<1x128xf32, #tpu.memory_space<vmem>>, vector<1x128xf32>
      %28 = vector.broadcast %27 : vector<1x128xf32> to vector<16x128xf32>
      %29 = arith.addf %26, %28 : vector<16x128xf32>
      %cst_23 = arith.constant 0.000000e+00 : f32
      %30 = vector.broadcast %cst_23 : f32 to vector<16x128xf32>
      %31 = arith.maximumf %29, %30 : vector<16x128xf32>
      %32 = arith.truncf %31 : vector<16x128xf32> to vector<16x128xbf16>
      %c0_24 = arith.constant 0 : index
      %c0_25 = arith.constant 0 : index
      %33 = vector.load %arg10[%c0_24, %c0_25] : memref<128x128xbf16, #tpu.memory_space<vmem>>, vector<128x128xbf16>
      %cst_26 = arith.constant dense<0.000000e+00> : vector<16x128xf32>
      %34 = tpu.matmul %32, %33, %cst_26 {dimension_numbers = #tpu.dot_dimension_numbers<[1], [0], [0], [1], [0, 0, 1, 1], [], []>} : vector<16x128xbf16>, vector<128x128xbf16>, vector<16x128xf32> -> vector<16x128xf32>
      %c0_27 = arith.constant 0 : index
      %c0_28 = arith.constant 0 : index
      %35 = vector.load %arg11[%c0_27, %c0_28] : memref<1x128xf32, #tpu.memory_space<vmem>>, vector<1x128xf32>
      %36 = vector.broadcast %35 : vector<1x128xf32> to vector<16x128xf32>
      %37 = arith.addf %34, %36 : vector<16x128xf32>
      %38 = arith.truncf %37 : vector<16x128xf32> to vector<16x128xbf16>
      %c0_29 = arith.constant 0 : index
      %c0_30 = arith.constant 0 : index
      %c0_31 = arith.constant 0 : index
      %39 = vector.load %arg12[%c0_29, %c0_30, %c0_31] : memref<1x16x128xbf16, #tpu.memory_space<vmem>>, vector<1x16x128xbf16>
      %40 = vector.shape_cast %39 : vector<1x16x128xbf16> to vector<16x128xbf16>
      %41 = vector.shape_cast %38 : vector<16x128xbf16> to vector<1x16x128xbf16>
      tpu.vector_store %arg12[%c0_29, %c0_30, %c0_31], %41 {strides = array<i32>} : memref<1x16x128xbf16, #tpu.memory_space<vmem>>, vector<1x16x128xbf16>,
    } else {
    }
    %c0_i32_1 = arith.constant 0 : i32
    %3 = arith.cmpi ne, %arg0, %c0_i32_1 : i32
    %4 = arith.extui %3 : i1 to i32
    %c0_i32_2 = arith.constant 0 : i32
    %5 = arith.cmpi ne, %4, %c0_i32_2 : i32
    scf.if %5 {
      %c0 = arith.constant 0 : index
      %c0_3 = arith.constant 0 : index
      %6 = vector.load %arg3[%c0, %c0_3] : memref<16x128xbf16, #tpu.memory_space<vmem>>, vector<16x128xbf16>
      %c0_4 = arith.constant 0 : index
      %c0_5 = arith.constant 0 : index
      %c0_6 = arith.constant 0 : index
      %7 = vector.load %arg4[%c0_4, %c0_5, %c0_6] : memref<1x128x128xbf16, #tpu.memory_space<vmem>>, vector<1x128x128xbf16>
      %8 = vector.shape_cast %7 : vector<1x128x128xbf16> to vector<128x128xbf16>
      %cst = arith.constant dense<0.000000e+00> : vector<16x128xf32>
      %9 = tpu.matmul %6, %8, %cst {dimension_numbers = #tpu.dot_dimension_numbers<[1], [0], [0], [1], [0, 0, 1, 1], [], []>} : vector<16x128xbf16>, vector<128x128xbf16>, vector<16x128xf32> -> vector<16x128xf32>
      %c0_7 = arith.constant 0 : index
      %c0_8 = arith.constant 0 : index
      %c0_9 = arith.constant 0 : index
      %10 = vector.load %arg5[%c0_7, %c0_8, %c0_9] : memref<1x1x128xf32, #tpu.memory_space<vmem>>, vector<1x1x128xf32>
      %11 = vector.shape_cast %10 : vector<1x1x128xf32> to vector<1x128xf32>
      %12 = vector.broadcast %11 : vector<1x128xf32> to vector<16x128xf32>
      %13 = arith.addf %9, %12 : vector<16x128xf32>
      %cst_10 = arith.constant 0.000000e+00 : f32
      %14 = vector.broadcast %cst_10 : f32 to vector<16x128xf32>
      %15 = arith.maximumf %13, %14 : vector<16x128xf32>
      %16 = arith.truncf %15 : vector<16x128xf32> to vector<16x128xbf16>
      %c0_11 = arith.constant 0 : index
      %c0_12 = arith.constant 0 : index
      %c0_13 = arith.constant 0 : index
      %17 = vector.load %arg6[%c0_11, %c0_12, %c0_13] : memref<1x128x128xbf16, #tpu.memory_space<vmem>>, vector<1x128x128xbf16>
      %18 = vector.shape_cast %17 : vector<1x128x128xbf16> to vector<128x128xbf16>
      %cst_14 = arith.constant dense<0.000000e+00> : vector<16x128xf32>
      %19 = tpu.matmul %16, %18, %cst_14 {dimension_numbers = #tpu.dot_dimension_numbers<[1], [0], [0], [1], [0, 0, 1, 1], [], []>} : vector<16x128xbf16>, vector<128x128xbf16>, vector<16x128xf32> -> vector<16x128xf32>
      %c0_15 = arith.constant 0 : index
      %c0_16 = arith.constant 0 : index
      %c0_17 = arith.constant 0 : index
      %20 = vector.load %arg7[%c0_15, %c0_16, %c0_17] : memref<1x1x128xf32, #tpu.memory_space<vmem>>, vector<1x1x128xf32>
      %21 = vector.shape_cast %20 : vector<1x1x128xf32> to vector<1x128xf32>
      %22 = vector.broadcast %21 : vector<1x128xf32> to vector<16x128xf32>
      %23 = arith.addf %19, %22 : vector<16x128xf32>
      %24 = arith.truncf %23 : vector<16x128xf32> to vector<16x128xbf16>
      %c0_18 = arith.constant 0 : index
      %c0_19 = arith.constant 0 : index
      %c0_20 = arith.constant 0 : index
      %25 = vector.load %arg12[%c0_18, %c0_19, %c0_20] : memref<1x16x128xbf16, #tpu.memory_space<vmem>>, vector<1x16x128xbf16>
      %26 = vector.shape_cast %25 : vector<1x16x128xbf16> to vector<16x128xbf16>
      %27 = vector.shape_cast %24 : vector<16x128xbf16> to vector<1x16x128xbf16>
      tpu.vector_store %arg12[%c0_18, %c0_19, %c0_20], %27 {strides = array<i32>} : memref<1x16x128xbf16, #tpu.memory_space<vmem>>, vector<1x16x128xbf16>,
    } else {
    }
    return
  }
  func.func @transform_0(%arg0: i32, %arg1: i32) -> (i32, i32) {
    %c1_i32 = arith.constant 1 : i32
    %0 = arith.subi %c1_i32, %arg0 : i32
    %1 = arith.muli %arg1, %0 : i32
    %c0_i32 = arith.constant 0 : i32
    %c0_i32_0 = arith.constant 0 : i32
    return %1, %c0_i32 : i32, i32
  }
  func.func @transform_1(%arg0: i32, %arg1: i32) -> (i32, i32) {
    %0 = arith.muli %arg1, %arg0 : i32
    %c0_i32 = arith.constant 0 : i32
    %c0_i32_0 = arith.constant 0 : i32
    return %0, %c0_i32 : i32, i32
  }
  func.func @transform_2(%arg0: i32, %arg1: i32) -> (i32, i32, i32) {
    %c0_i32 = arith.constant 0 : i32
    %c0_i32_0 = arith.constant 0 : i32
    %c0_i32_1 = arith.constant 0 : i32
    return %arg0, %c0_i32, %c0_i32_0 : i32, i32, i32
  }
  func.func @transform_3(%arg0: i32, %arg1: i32) -> (i32, i32, i32) {
    %c0_i32 = arith.constant 0 : i32
    %c0_i32_0 = arith.constant 0 : i32
    %c0_i32_1 = arith.constant 0 : i32
    return %arg0, %c0_i32, %c0_i32_0 : i32, i32, i32
  }
  func.func @transform_4(%arg0: i32, %arg1: i32) -> (i32, i32, i32) {
    %c0_i32 = arith.constant 0 : i32
    %c0_i32_0 = arith.constant 0 : i32
    %c0_i32_1 = arith.constant 0 : i32
    return %arg0, %c0_i32, %c0_i32_0 : i32, i32, i32
  }
  func.func @transform_5(%arg0: i32, %arg1: i32) -> (i32, i32, i32) {
    %c0_i32 = arith.constant 0 : i32
    %c0_i32_0 = arith.constant 0 : i32
    %c0_i32_1 = arith.constant 0 : i32
    return %arg0, %c0_i32, %c0_i32_0 : i32, i32, i32
  }
  func.func @transform_6(%arg0: i32, %arg1: i32) -> (i32, i32) {
    %c0_i32 = arith.constant 0 : i32
    %c0_i32_0 = arith.constant 0 : i32
    %c0_i32_1 = arith.constant 0 : i32
    return %c0_i32, %c0_i32_0 : i32, i32
  }
  func.func @transform_7(%arg0: i32, %arg1: i32) -> (i32, i32) {
    %c0_i32 = arith.constant 0 : i32
    %c0_i32_0 = arith.constant 0 : i32
    %c0_i32_1 = arith.constant 0 : i32
    return %c0_i32, %c0_i32_0 : i32, i32
  }
  func.func @transform_8(%arg0: i32, %arg1: i32) -> (i32, i32) {
    %c0_i32 = arith.constant 0 : i32
    %c0_i32_0 = arith.constant 0 : i32
    %c0_i32_1 = arith.constant 0 : i32
    return %c0_i32, %c0_i32_0 : i32, i32
  }
  func.func @transform_9(%arg0: i32, %arg1: i32) -> (i32, i32) {
    %c0_i32 = arith.constant 0 : i32
    %c0_i32_0 = arith.constant 0 : i32
    %c0_i32_1 = arith.constant 0 : i32
    return %c0_i32, %c0_i32_0 : i32, i32
  }
  func.func @transform_10(%arg0: i32, %arg1: i32) -> (i32, i32, i32) {
    %c0_i32 = arith.constant 0 : i32
    %c0_i32_0 = arith.constant 0 : i32
    return %arg0, %arg1, %c0_i32 : i32, i32, i32
  }
}

</mosaic_0001>

<llo_original>
// kernel: blp_forward_pallas.1
$region0: #{blp_forward_pallas.1}
  #allocation0 [shape = 'u32[]', space=smem, size = 0x4, offset = 0x4, fixed_abs, tag = 'smem constant byte address 0x4 - core index']
  #allocation1 [shape = 'u32[72,128]{1,0:T(1,128)}', space=vmem, size = 0x9000, scoped, tag = 'internal scratch']
  %s0 = inlined_call_operand.vmem [shape: bf16[16,128], index: 0, kind: input, shape index: {}]
  %s1 = inlined_call_operand.vmem [shape: bf16[16,128], index: 1, kind: input, shape index: {}]
  %s2 = inlined_call_operand.hbm [shape: bf16[2,128,128], index: 2, kind: input, shape index: {}]
  %s3 = inlined_call_operand.vmem [shape: f32[2,1,128], index: 3, kind: input, shape index: {}]
  %s4 = inlined_call_operand.hbm [shape: bf16[2,128,128], index: 4, kind: input, shape index: {}]
  %s5 = inlined_call_operand.vmem [shape: f32[2,1,128], index: 5, kind: input, shape index: {}]
  %s6 = inlined_call_operand.hbm [shape: bf16[128,128], index: 6, kind: input, shape index: {}]
  %s7 = inlined_call_operand.vmem [shape: f32[1,128], index: 7, kind: input, shape index: {}]
  %s8 = inlined_call_operand.hbm [shape: bf16[128,128], index: 8, kind: input, shape index: {}]
  %s9 = inlined_call_operand.vmem [shape: f32[1,128], index: 9, kind: input, shape index: {}]
  %s10 = inlined_call_operand.vmem [shape: bf16[2,16,128], index: 10, kind: output, shape index: {}]
  %s11 = sld [smem:[#allocation0]]
  $region97: #{blp_forward_pallas.1} parent=0
    _
  %s13 = ssub.s32 1, %s11
  %s14 = scalar_select 0, %s13, %s11
  $region1: #{blp_forward_pallas.1} parent=0
    #allocation2 [shape = 'u8[32768]{0}', space=vmem, size = 0x8000, scoped, tag = 'input window, operand 2, single buffered']
    #allocation3 [shape = 's32[2]{0}', space=sflag, size = 0x8, scoped, tag = 'scoped memory for blp_forward_pallas.1']
    #allocation4 [shape = 'u8[32768]{0}', space=vmem, size = 0x8000, scoped, tag = 'input window, operand 4, single buffered']
    #allocation5 [shape = 's32[1]{0}', space=sflag, size = 0x4, scoped, tag = 'scoped memory for blp_forward_pallas.1']
    #allocation6 [shape = 'u8[32768]{0}', space=vmem, size = 0x8000, scoped, tag = 'input window, operand 6, single buffered']
    #allocation7 [shape = 'u8[32768]{0}', space=vmem, size = 0x8000, scoped, tag = 'input window, operand 8, single buffered']
    #allocation8 [shape = 's32[1]{0}', space=sflag, size = 0x4, scoped, tag = 'scoped memory for blp_forward_pallas.1']
    %15 = vsyncpa [#allocation3], 0
    %16 = vsyncpa [#allocation5], 0
    %17 = vsyncpa [#allocation8], 0
    loop: start=0, step=1, limit=4
    $region2: #{blp_forward_pallas.1} parent=1 // loop_pre_header
      _
    $region3: #{blp_forward_pallas.1} parent=1 // loop_header
      %s19 = sphi 0, %s23
      %p20 = scmp.ge.s32.totalorder %s19, 4
      %s26 = sphi 0, %s38
      %s27 = sphi 0, %s34
      %s28 = sphi 0, %s26
      %s29 = sphi 0, %s27
      %s30 = sphi 0, %s28
      %s31 = sphi 0, %s29
      %s45 = sphi 0, %s47
      %s48 = sphi 0, %s45
      %s49 = sphi 0, %s48
      %s65 = sphi 0, %s49
      %s73 = sphi 0, %s75
      %s76 = sphi 0, %s73
      %s77 = sphi 0, %s76
      %s93 = sphi 0, %s77
      %s99 = sphi 0, %s101
      %s102 = sphi 0, %s99
      %s103 = sphi 0, %s102
      %s119 = sphi 0, %s103
      %s125 = sphi 0, %s127
      %s128 = sphi 0, %s125
      %s129 = sphi 0, %s128
      %s145 = sphi 0, %s129
      %s151 = sphi 0, %s153
      %s154 = sphi 0, %s151
      %s155 = sphi 0, %s154
      %s171 = sphi 0, %s155
      %s177 = sphi 0, %s179
      %s180 = sphi 0, %s177
      %s181 = sphi 0, %s180
      %s197 = sphi 0, %s181
      %s201 = sphi 0, %s201
      %s203 = sphi 0, %s201
      %s204 = sphi 0, %s203
      %s218 = sphi 0, %s204
      %s222 = sphi 0, %s222
      %s224 = sphi 0, %s222
      %s225 = sphi 0, %s224
      %s239 = sphi 0, %s225
      %s243 = sphi 0, %s243
      %s245 = sphi 0, %s243
      %s246 = sphi 0, %s245
      %s260 = sphi 0, %s246
      %s264 = sphi 0, %s264
      %s266 = sphi 0, %s264
      %s267 = sphi 0, %s266
      %s281 = sphi 0, %s267
      %s289 = sphi 0, %s291
      %s292 = sphi 0, %s289
      %s293 = sphi 0, %s292
      %s309 = sphi 0, %s293
    $region4: #{blp_forward_pallas.1} parent=1 // loop_header_branch
      %22 = sbr.rel (%p20) target = $region8
    $region5: #{blp_forward_pallas.1} parent=1 // loop_body
      %s24 = ssub.s32 %s19, 1
      %s25 = ssub.s32 %s19, 2
      %s32 = sadd.s32 1, %s27
      %p33 = scmp.ge.s32.totalorder %s32, 1
      %s34 = scalar_select %p33, 0, %s32
      %s35 = sadd.s32 1, %s26
      %s36 = scalar_select %p33, %s35, %s26
      %p37 = scmp.ge.s32.totalorder %s36, 2
      %s38 = scalar_select %p37, 0, %s36
      %s39 = ssub.s32 1, %s26
      %s40 = smul.u32 %s27, %s39
      %s41 = ssub.s32 1, %s38
      %s42 = smul.u32 %s34, %s41
      %s43 = ssub.s32 %s40, %s42
      %p44 = scmp.eq.s32.totalorder %s43, 0
      %s46 = sadd.s32 %s45, 1
      %s47 = scalar_select %p44, %s45, %s46
      %p50 = pneg %p44
      %p51 = scmp.eq.s32.totalorder %s19, 1
      %p52 = por %p50, %p51
      %p53 = scmp.ne.s32.totalorder %s45, %s48
      %p54 = scmp.eq.s32.totalorder %s19, 0
      %p55 = por %p53, %p54
      %p56 = scmp.ne.s32.totalorder %s45, %s48
      %p57 = scmp.eq.s32.totalorder %s24, 1
      %p58 = por %p56, %p57
      %p59 = scmp.ne.s32.totalorder %s48, %s49
      %p60 = scmp.eq.s32.totalorder %s24, 0
      %p61 = por %p59, %p60
      %p62 = scmp.ne.s32.totalorder %s48, %s49
      %p63 = scmp.eq.s32.totalorder %s25, 1
      %p64 = por %p62, %p63
      %p66 = scmp.ne.s32.totalorder %s49, %s65
      %p67 = scmp.eq.s32.totalorder %s25, 0
      %p68 = por %p66, %p67
      %s69 = smul.u32 %s27, %s26
      %s70 = smul.u32 %s34, %s38
      %s71 = ssub.s32 %s69, %s70
      %p72 = scmp.eq.s32.totalorder %s71, 0
      %s74 = sadd.s32 %s73, 1
      %s75 = scalar_select %p72, %s73, %s74
      %p78 = pneg %p72
      %p79 = scmp.eq.s32.totalorder %s19, 1
      %p80 = por %p78, %p79
      %p81 = scmp.ne.s32.totalorder %s73, %s76
      %p82 = scmp.eq.s32.totalorder %s19, 0
      %p83 = por %p81, %p82
      %p84 = scmp.ne.s32.totalorder %s73, %s76
      %p85 = scmp.eq.s32.totalorder %s24, 1
      %p86 = por %p84, %p85
      %p87 = scmp.ne.s32.totalorder %s76, %s77
      %p88 = scmp.eq.s32.totalorder %s24, 0
      %p89 = por %p87, %p88
      %p90 = scmp.ne.s32.totalorder %s76, %s77
      %p91 = scmp.eq.s32.totalorder %s25, 1
      %p92 = por %p90, %p91
      %p94 = scmp.ne.s32.totalorder %s77, %s93
      %p95 = scmp.eq.s32.totalorder %s25, 0
      %p96 = por %p94, %p95
      %s97 = ssub.s32 %s26, %s38
      %p98 = scmp.eq.s32.totalorder %s97, 0
      %s100 = sadd.s32 %s99, 1
      %s101 = scalar_select %p98, %s99, %s100
      %p104 = pneg %p98
      %p105 = scmp.eq.s32.totalorder %s19, 1
      %p106 = por %p104, %p105
      %p107 = scmp.ne.s32.totalorder %s99, %s102
      %p108 = scmp.eq.s32.totalorder %s19, 0
      %p109 = por %p107, %p108
      %p110 = scmp.ne.s32.totalorder %s99, %s102
      %p111 = scmp.eq.s32.totalorder %s24, 1
      %p112 = por %p110, %p111
      %p113 = scmp.ne.s32.totalorder %s102, %s103
      %p114 = scmp.eq.s32.totalorder %s24, 0
      %p115 = por %p113, %p114
      %p116 = scmp.ne.s32.totalorder %s102, %s103
      %p117 = scmp.eq.s32.totalorder %s25, 1
      %p118 = por %p116, %p117
      %p120 = scmp.ne.s32.totalorder %s103, %s119
      %p121 = scmp.eq.s32.totalorder %s25, 0
      %p122 = por %p120, %p121
      %s123 = ssub.s32 %s26, %s38
      %p124 = scmp.eq.s32.totalorder %s123, 0
      %s126 = sadd.s32 %s125, 1
      %s127 = scalar_select %p124, %s125, %s126
      %p130 = pneg %p124
      %p131 = scmp.eq.s32.totalorder %s19, 1
      %p132 = por %p130, %p131
      %p133 = scmp.ne.s32.totalorder %s125, %s128
      %p134 = scmp.eq.s32.totalorder %s19, 0
      %p135 = por %p133, %p134
      %p136 = scmp.ne.s32.totalorder %s125, %s128
      %p137 = scmp.eq.s32.totalorder %s24, 1
      %p138 = por %p136, %p137
      %p139 = scmp.ne.s32.totalorder %s128, %s129
      %p140 = scmp.eq.s32.totalorder %s24, 0
      %p141 = por %p139, %p140
      %p142 = scmp.ne.s32.totalorder %s128, %s129
      %p143 = scmp.eq.s32.totalorder %s25, 1
      %p144 = por %p142, %p143
      %p146 = scmp.ne.s32.totalorder %s129, %s145
      %p147 = scmp.eq.s32.totalorder %s25, 0
      %p148 = por %p146, %p147
      %s149 = ssub.s32 %s26, %s38
      %p150 = scmp.eq.s32.totalorder %s149, 0
      %s152 = sadd.s32 %s151, 1
      %s153 = scalar_select %p150, %s151, %s152
      %p156 = pneg %p150
      %p157 = scmp.eq.s32.totalorder %s19, 1
      %p158 = por %p156, %p157
      %p159 = scmp.ne.s32.totalorder %s151, %s154
      %p160 = scmp.eq.s32.totalorder %s19, 0
      %p161 = por %p159, %p160
      %p162 = scmp.ne.s32.totalorder %s151, %s154
      %p163 = scmp.eq.s32.totalorder %s24, 1
      %p164 = por %p162, %p163
      %p165 = scmp.ne.s32.totalorder %s154, %s155
      %p166 = scmp.eq.s32.totalorder %s24, 0
      %p167 = por %p165, %p166
      %p168 = scmp.ne.s32.totalorder %s154, %s155
      %p169 = scmp.eq.s32.totalorder %s25, 1
      %p170 = por %p168, %p169
      %p172 = scmp.ne.s32.totalorder %s155, %s171
      %p173 = scmp.eq.s32.totalorder %s25, 0
      %p174 = por %p172, %p173
      %s175 = ssub.s32 %s26, %s38
      %p176 = scmp.eq.s32.totalorder %s175, 0
      %s178 = sadd.s32 %s177, 1
      %s179 = scalar_select %p176, %s177, %s178
      %p182 = pneg %p176
      %p183 = scmp.eq.s32.totalorder %s19, 1
      %p184 = por %p182, %p183
      %p185 = scmp.ne.s32.totalorder %s177, %s180
      %p186 = scmp.eq.s32.totalorder %s19, 0
      %p187 = por %p185, %p186
      %p188 = scmp.ne.s32.totalorder %s177, %s180
      %p189 = scmp.eq.s32.totalorder %s24, 1
      %p190 = por %p188, %p189
      %p191 = scmp.ne.s32.totalorder %s180, %s181
      %p192 = scmp.eq.s32.totalorder %s24, 0
      %p193 = por %p191, %p192
      %p194 = scmp.ne.s32.totalorder %s180, %s181
      %p195 = scmp.eq.s32.totalorder %s25, 1
      %p196 = por %p194, %p195
      %p198 = scmp.ne.s32.totalorder %s181, %s197
      %p199 = scmp.eq.s32.totalorder %s25, 0
      %p200 = por %p198, %p199
      %s202 = sadd.s32 %s201, 1
      %p205 = scmp.eq.s32.totalorder %s19, 1
      %p206 = scmp.ne.s32.totalorder %s201, %s203
      %p207 = scmp.eq.s32.totalorder %s19, 0
      %p208 = por %p206, %p207
      %p209 = scmp.ne.s32.totalorder %s201, %s203
      %p210 = scmp.eq.s32.totalorder %s24, 1
      %p211 = por %p209, %p210
      %p212 = scmp.ne.s32.totalorder %s203, %s204
      %p213 = scmp.eq.s32.totalorder %s24, 0
      %p214 = por %p212, %p213
      %p215 = scmp.ne.s32.totalorder %s203, %s204
      %p216 = scmp.eq.s32.totalorder %s25, 1
      %p217 = por %p215, %p216
      %p219 = scmp.ne.s32.totalorder %s204, %s218
      %p220 = scmp.eq.s32.totalorder %s25, 0
      %p221 = por %p219, %p220
      %s223 = sadd.s32 %s222, 1
      %p226 = scmp.eq.s32.totalorder %s19, 1
      %p227 = scmp.ne.s32.totalorder %s222, %s224
      %p228 = scmp.eq.s32.totalorder %s19, 0
      %p229 = por %p227, %p228
      %p230 = scmp.ne.s32.totalorder %s222, %s224
      %p231 = scmp.eq.s32.totalorder %s24, 1
      %p232 = por %p230, %p231
      %p233 = scmp.ne.s32.totalorder %s224, %s225
      %p234 = scmp.eq.s32.totalorder %s24, 0
      %p235 = por %p233, %p234
      %p236 = scmp.ne.s32.totalorder %s224, %s225
      %p237 = scmp.eq.s32.totalorder %s25, 1
      %p238 = por %p236, %p237
      %p240 = scmp.ne.s32.totalorder %s225, %s239
      %p241 = scmp.eq.s32.totalorder %s25, 0
      %p242 = por %p240, %p241
      %s244 = sadd.s32 %s243, 1
      %p247 = scmp.eq.s32.totalorder %s19, 1
      %p248 = scmp.ne.s32.totalorder %s243, %s245
      %p249 = scmp.eq.s32.totalorder %s19, 0
      %p250 = por %p248, %p249
      %p251 = scmp.ne.s32.totalorder %s243, %s245
      %p252 = scmp.eq.s32.totalorder %s24, 1
      %p253 = por %p251, %p252
      %p254 = scmp.ne.s32.totalorder %s245, %s246
      %p255 = scmp.eq.s32.totalorder %s24, 0
      %p256 = por %p254, %p255
      %p257 = scmp.ne.s32.totalorder %s245, %s246
      %p258 = scmp.eq.s32.totalorder %s25, 1
      %p259 = por %p257, %p258
      %p261 = scmp.ne.s32.totalorder %s246, %s260
      %p262 = scmp.eq.s32.totalorder %s25, 0
      %p263 = por %p261, %p262
      %s265 = sadd.s32 %s264, 1
      %p268 = scmp.eq.s32.totalorder %s19, 1
      %p269 = scmp.ne.s32.totalorder %s264, %s266
      %p270 = scmp.eq.s32.totalorder %s19, 0
      %p271 = por %p269, %p270
      %p272 = scmp.ne.s32.totalorder %s264, %s266
      %p273 = scmp.eq.s32.totalorder %s24, 1
      %p274 = por %p272, %p273
      %p275 = scmp.ne.s32.totalorder %s266, %s267
      %p276 = scmp.eq.s32.totalorder %s24, 0
      %p277 = por %p275, %p276
      %p278 = scmp.ne.s32.totalorder %s266, %s267
      %p279 = scmp.eq.s32.totalorder %s25, 1
      %p280 = por %p278, %p279
      %p282 = scmp.ne.s32.totalorder %s267, %s281
      %p283 = scmp.eq.s32.totalorder %s25, 0
      %p284 = por %p282, %p283
      %s285 = ssub.s32 %s26, %s38
      %s286 = ssub.s32 %s27, %s34
      %s287 = sor.u32 %s285, %s286
      %p288 = scmp.eq.s32.totalorder %s287, 0
      %s290 = sadd.s32 %s289, 1
      %s291 = scalar_select %p288, %s289, %s290
      %p294 = pneg %p288
      %p295 = scmp.eq.s32.totalorder %s19, 1
      %p296 = por %p294, %p295
      %p297 = scmp.ne.s32.totalorder %s289, %s292
      %p298 = scmp.eq.s32.totalorder %s19, 0
      %p299 = por %p297, %p298
      %p300 = scmp.ne.s32.totalorder %s289, %s292
      %p301 = scmp.eq.s32.totalorder %s24, 1
      %p302 = por %p300, %p301
      %p303 = scmp.ne.s32.totalorder %s292, %s293
      %p304 = scmp.eq.s32.totalorder %s24, 0
      %p305 = por %p303, %p304
      %p306 = scmp.ne.s32.totalorder %s292, %s293
      %p307 = scmp.eq.s32.totalorder %s25, 1
      %p308 = por %p306, %p307
      %p310 = scmp.ne.s32.totalorder %s293, %s309
      %p311 = scmp.eq.s32.totalorder %s25, 0
      %p312 = por %p310, %p311
      %p313 = scmp.le.s32.totalorder 1, %s19
      %p314 = scmp.lt.s32.totalorder %s19, 3
      %p315 = pnand %p313, %p314
      %p316 = pneg %p315
      // Predicated region
      $region9: #{blp_forward_pallas.1} parent=5 // pred_check
        _
      $region10: #{blp_forward_pallas.1} parent=5 // pred_check_branch
        %318 = sbr.rel (%p315) target = $region12
      $region11: #{blp_forward_pallas.1} parent=5 // pred_region
        %s319 = ssub.s32 %s19, 1
        // Predicated region
        $region13: #{blp_forward_pallas.1} parent=11 // pred_check
          %p320 = pneg %p115
        $region14: #{blp_forward_pallas.1} parent=11 // pred_check_branch
          %322 = sbr.rel (%p320) target = $region16
        $region15: #{blp_forward_pallas.1} parent=11 // pred_region
          %324 = vsyncadd [#allocation3], 0
          %s325 = smul.addr %s28, 16
          %s326 = smul.addr %s325, 4
          %s327 = scalar_lea.hbm %s2, %s326
          %s328 = sshll.u32 %s327, 4
          %s329 = int_to_ptr.hbm [resolvable:$true] %s328
          %s330 = sshll.u32 [#allocation2], 4
          %s331 = int_to_ptr.vmem [resolvable:$true] %s330
          %336 = dma.hbm_to_vmem [thread:$0]  %s329, 1024, %s331, [#allocation3], 64, 64, 4
        $region16: #{blp_forward_pallas.1} parent=11 // pred_fallthru
          _
        // Predicated region
        $region17: #{blp_forward_pallas.1} parent=11 // pred_check
          %p337 = pneg %p141
        $region18: #{blp_forward_pallas.1} parent=11 // pred_check_branch
          %339 = sbr.rel (%p337) target = $region20
        $region19: #{blp_forward_pallas.1} parent=11 // pred_region
          %p340 = scmp.lt.s32.totalorder %s28, 1
          %s341 = scalar_select %p340, %s28, 1
          %s342 = scalar_lea.vmem %s3, %s341
        $region20: #{blp_forward_pallas.1} parent=11 // pred_fallthru
          _
        // Predicated region
        $region21: #{blp_forward_pallas.1} parent=11 // pred_check
          %p343 = pneg %p167
        $region22: #{blp_forward_pallas.1} parent=11 // pred_check_branch
          %345 = sbr.rel (%p343) target = $region24
        $region23: #{blp_forward_pallas.1} parent=11 // pred_region
          %347 = vsyncadd [#allocation5], 0
          %s348 = smul.addr %s28, 16
          %s349 = smul.addr %s348, 4
          %s350 = scalar_lea.hbm %s4, %s349
          %s351 = sshll.u32 %s350, 4
          %s352 = int_to_ptr.hbm [resolvable:$true] %s351
          %s353 = sshll.u32 [#allocation4], 4
          %s354 = int_to_ptr.vmem [resolvable:$true] %s353
          %359 = dma.hbm_to_vmem [thread:$0]  %s352, 1024, %s354, [#allocation5], 64, 64, 4
        $region24: #{blp_forward_pallas.1} parent=11 // pred_fallthru
          _
        // Predicated region
        $region25: #{blp_forward_pallas.1} parent=11 // pred_check
          %p360 = pneg %p193
        $region26: #{blp_forward_pallas.1} parent=11 // pred_check_branch
          %362 = sbr.rel (%p360) target = $region28
        $region27: #{blp_forward_pallas.1} parent=11 // pred_region
          %p363 = scmp.lt.s32.totalorder %s28, 1
          %s364 = scalar_select %p363, %s28, 1
          %s365 = scalar_lea.vmem %s5, %s364
        $region28: #{blp_forward_pallas.1} parent=11 // pred_fallthru
          _
        // Predicated region
        $region29: #{blp_forward_pallas.1} parent=11 // pred_check
          %p366 = pneg %p214
        $region30: #{blp_forward_pallas.1} parent=11 // pred_check_branch
          %368 = sbr.rel (%p366) target = $region32
        $region31: #{blp_forward_pallas.1} parent=11 // pred_region
          %370 = vsyncadd [#allocation5], 0
          %s371 = sshll.u32 %s6, 4
          %s372 = int_to_ptr.hbm [resolvable:$true] %s371
          %s373 = sshll.u32 [#allocation6], 4
          %s374 = int_to_ptr.vmem [resolvable:$true] %s373
          %379 = dma.hbm_to_vmem [thread:$0]  %s372, 1024, %s374, [#allocation5], 64, 64, 4
        $region32: #{blp_forward_pallas.1} parent=11 // pred_fallthru
          _
        // Predicated region
        $region33: #{blp_forward_pallas.1} parent=11 // pred_check
          %p380 = pneg %p235
        $region34: #{blp_forward_pallas.1} parent=11 // pred_check_branch
          %382 = sbr.rel (%p380) target = $region36
        $region35: #{blp_forward_pallas.1} parent=11 // pred_region
          _
        $region36: #{blp_forward_pallas.1} parent=11 // pred_fallthru
          _
        // Predicated region
        $region37: #{blp_forward_pallas.1} parent=11 // pred_check
          %p383 = pneg %p256
        $region38: #{blp_forward_pallas.1} parent=11 // pred_check_branch
          %385 = sbr.rel (%p383) target = $region40
        $region39: #{blp_forward_pallas.1} parent=11 // pred_region
          %387 = vsyncadd [#allocation8], 0
          %s388 = sshll.u32 %s8, 4
          %s389 = int_to_ptr.hbm [resolvable:$true] %s388
          %s390 = sshll.u32 [#allocation7], 4
          %s391 = int_to_ptr.vmem [resolvable:$true] %s390
          %396 = dma.hbm_to_vmem [thread:$0]  %s389, 1024, %s391, [#allocation8], 64, 64, 4
        $region40: #{blp_forward_pallas.1} parent=11 // pred_fallthru
          _
        // Predicated region
        $region41: #{blp_forward_pallas.1} parent=11 // pred_check
          %p397 = pneg %p277
        $region42: #{blp_forward_pallas.1} parent=11 // pred_check_branch
          %399 = sbr.rel (%p397) target = $region44
        $region43: #{blp_forward_pallas.1} parent=11 // pred_region
          _
        $region44: #{blp_forward_pallas.1} parent=11 // pred_fallthru
          _
      $region12: #{blp_forward_pallas.1} parent=5 // pred_fallthru
        _
      %p400 = scmp.lt.s32.totalorder %s19, 2
      // Predicated region
      $region45: #{blp_forward_pallas.1} parent=5 // pred_check
        %p401 = pneg %p400
      $region46: #{blp_forward_pallas.1} parent=5 // pred_check_branch
        %403 = sbr.rel (%p401) target = $region48
      $region47: #{blp_forward_pallas.1} parent=5 // pred_region
        // Predicated region
        $region49: #{blp_forward_pallas.1} parent=47 // pred_check
          %p404 = pneg %p55
        $region50: #{blp_forward_pallas.1} parent=47 // pred_check_branch
          %406 = sbr.rel (%p404) target = $region52
        $region51: #{blp_forward_pallas.1} parent=47 // pred_region
          %s407 = ssub.s32 1, %s26
          %s408 = smul.u32 %s27, %s407
          %s409 = smul.u32 2, %s408
          %p410 = scmp.lt.s32.totalorder %s409, 1
          %s411 = scalar_select %p410, %s409, 1
          %s412 = smul.addr %s411, 4
          %s413 = scalar_lea.vmem %s0, %s412
          %s414 = ssub.s32 1, %s26
          %s415 = smul.u32 %s27, %s414
          %s416 = smul.u32 2, %s415
        $region52: #{blp_forward_pallas.1} parent=47 // pred_fallthru
          _
        // Predicated region
        $region53: #{blp_forward_pallas.1} parent=47 // pred_check
          %p417 = pneg %p83
        $region54: #{blp_forward_pallas.1} parent=47 // pred_check_branch
          %419 = sbr.rel (%p417) target = $region56
        $region55: #{blp_forward_pallas.1} parent=47 // pred_region
          %s420 = smul.u32 %s27, %s26
          %s421 = smul.u32 2, %s420
          %p422 = scmp.lt.s32.totalorder %s421, 1
          %s423 = scalar_select %p422, %s421, 1
          %s424 = smul.addr %s423, 4
          %s425 = scalar_lea.vmem %s1, %s424
          %s426 = smul.u32 %s27, %s26
          %s427 = smul.u32 2, %s426
        $region56: #{blp_forward_pallas.1} parent=47 // pred_fallthru
          _
      $region48: #{blp_forward_pallas.1} parent=5 // pred_fallthru
        _
      %p428 = scmp.le.s32.totalorder 1, %s19
      %p429 = scmp.lt.s32.totalorder %s19, 3
      %p430 = pnand %p428, %p429
      %p431 = pneg %p430
      // Predicated region
      $region57: #{blp_forward_pallas.1} parent=5 // pred_check
        _
      $region58: #{blp_forward_pallas.1} parent=5 // pred_check_branch
        %433 = sbr.rel (%p430) target = $region60
      $region59: #{blp_forward_pallas.1} parent=5 // pred_region
        %s434 = ssub.s32 %s19, 1
        // Predicated region
        $region61: #{blp_forward_pallas.1} parent=59 // pred_check
          %p435 = pneg %p115
        $region62: #{blp_forward_pallas.1} parent=59 // pred_check_branch
          %437 = sbr.rel (%p435) target = $region64
        $region63: #{blp_forward_pallas.1} parent=59 // pred_region
          %439 = dma.done [#allocation3], 1024
        $region64: #{blp_forward_pallas.1} parent=59 // pred_fallthru
          _
        // Predicated region
        $region65: #{blp_forward_pallas.1} parent=59 // pred_check
          %p440 = pneg %p167
        $region66: #{blp_forward_pallas.1} parent=59 // pred_check_branch
          %442 = sbr.rel (%p440) target = $region68
        $region67: #{blp_forward_pallas.1} parent=59 // pred_region
          %444 = dma.done [#allocation5], 1024
        $region68: #{blp_forward_pallas.1} parent=59 // pred_fallthru
          _
        // Predicated region
        $region69: #{blp_forward_pallas.1} parent=59 // pred_check
          %p445 = pneg %p214
        $region70: #{blp_forward_pallas.1} parent=59 // pred_check_branch
          %447 = sbr.rel (%p445) target = $region72
        $region71: #{blp_forward_pallas.1} parent=59 // pred_region
          %449 = dma.done [#allocation5], 1024
        $region72: #{blp_forward_pallas.1} parent=59 // pred_fallthru
          _
        // Predicated region
        $region73: #{blp_forward_pallas.1} parent=59 // pred_check
          %p450 = pneg %p256
        $region74: #{blp_forward_pallas.1} parent=59 // pred_check_branch
          %452 = sbr.rel (%p450) target = $region76
        $region75: #{blp_forward_pallas.1} parent=59 // pred_region
          %454 = dma.done [#allocation8], 1024
        $region76: #{blp_forward_pallas.1} parent=59 // pred_fallthru
          _
        %s455 = ssub.s32 1, %s28
        %s456 = smul.u32 %s29, %s455
        %s457 = smul.u32 2, %s456
        %p458 = scmp.lt.s32.totalorder %s457, 1
        %s459 = scalar_select %p458, %s457, 1
        %s460 = smul.addr %s459, 4
        %s461 = scalar_lea.vmem %s0, %s460
        %p462 = pneg %p61
        %p463 = pneg %p58
        %s464 = smul.u32 %s29, %s28
        %s465 = smul.u32 2, %s464
        %p466 = scmp.lt.s32.totalorder %s465, 1
        %s467 = scalar_select %p466, %s465, 1
        %s468 = smul.addr %s467, 4
        %s469 = scalar_lea.vmem %s1, %s468
        %p470 = pneg %p89
        %p471 = pneg %p86
        %p472 = pneg %p115
        %p473 = pneg %p112
        %p474 = scmp.lt.s32.totalorder %s28, 1
        %s475 = scalar_select %p474, %s28, 1
        %s476 = scalar_lea.vmem %s3, %s475
        %p477 = pneg %p141
        %p478 = pneg %p138
        %p479 = pneg %p167
        %p480 = pneg %p164
        %p481 = scmp.lt.s32.totalorder %s28, 1
        %s482 = scalar_select %p481, %s28, 1
        %s483 = scalar_lea.vmem %s5, %s482
        %p484 = pneg %p193
        %p485 = pneg %p190
        %p486 = pneg %p214
        %p487 = pneg %p211
        %p488 = pneg %p235
        %p489 = pneg %p232
        %p490 = pneg %p256
        %p491 = pneg %p253
        %p492 = pneg %p277
        %p493 = pneg %p274
        %p494 = pneg %p305
        %p495 = pneg %p302
        %s496 = smul.u32 2, %s29
        %p497 = scmp.lt.s32.totalorder %s28, 1
        %s498 = scalar_select %p497, %s28, 1
        %p499 = scmp.lt.s32.totalorder %s496, 1
        %s500 = scalar_select %p499, %s496, 1
        %s501 = smul.addr %s498, 2
        %s502 = sadd.s32 %s500, %s501
        %s503 = smul.addr %s502, 4
        %s504 = scalar_lea.vmem %s10, %s503
        %s505 = ssub.s32 1, %s28
        %s506 = smul.u32 %s29, %s505
        %s507 = smul.u32 2, %s506
        %p508 = scmp.lt.s32.totalorder %s507, 1
        %s509 = scalar_select %p508, %s507, 1
        %s510 = smul.addr %s509, 4
        %s511 = scalar_lea.vmem %s0, %s510
        %s512 = ssub.s32 1, %s28
        %s513 = smul.u32 %s29, %s512
        %s514 = smul.u32 2, %s513
        %s515 = smul.u32 %s29, %s28
        %s516 = smul.u32 2, %s515
        %p517 = scmp.lt.s32.totalorder %s516, 1
        %s518 = scalar_select %p517, %s516, 1
        %s519 = smul.addr %s518, 4
        %s520 = scalar_lea.vmem %s1, %s519
        %s521 = smul.u32 %s29, %s28
        %s522 = smul.u32 2, %s521
        %p523 = scmp.lt.s32.totalorder %s28, 1
        %s524 = scalar_select %p523, %s28, 1
        %s525 = scalar_lea.vmem %s3, %s524
        %p526 = scmp.lt.s32.totalorder %s28, 1
        %s527 = scalar_select %p526, %s28, 1
        %s528 = scalar_lea.vmem %s5, %s527
        %s529 = smul.u32 2, %s29
        %p530 = scmp.lt.s32.totalorder %s28, 1
        %s531 = scalar_select %p530, %s28, 1
        %p532 = scmp.lt.s32.totalorder %s529, 1
        %s533 = scalar_select %p532, %s529, 1
        %s534 = smul.addr %s531, 2
        %s535 = sadd.s32 %s533, %s534
        %s536 = smul.addr %s535, 4
        %s537 = scalar_lea.vmem %s10, %s536
        %s538 = smul.u32 2, %s29
        %p539 = scmp.eq.s32.totalorder %s28, 0
        // Predicated region
        $region77: #{blp_forward_pallas.1} parent=59 // pred_check
          %p540 = pneg %p539
        $region78: #{blp_forward_pallas.1} parent=59 // pred_check_branch
          %542 = sbr.rel (%p540) target = $region80
        $region79: #{blp_forward_pallas.1} parent=59 // pred_region
          %v543 = vld [vmem:[%s511] sm:$0xf]
          %v544 = vld [vmem:[%s511 + $0x4] sm:$0xf]
          %v545 = vld [vmem:[#allocation2] sm:$0xf]
          %v546 = vld [vmem:[#allocation2 + $0x4] sm:$0xf]
          %v547 = vld [vmem:[#allocation2 + $0x8] sm:$0xf]
          %v548 = vld [vmem:[#allocation2 + $0xc] sm:$0xf]
          %v549 = vld [vmem:[#allocation2 + $0x10] sm:$0xf]
          %v550 = vld [vmem:[#allocation2 + $0x14] sm:$0xf]
          %v551 = vld [vmem:[#allocation2 + $0x18] sm:$0xf]
          %v552 = vld [vmem:[#allocation2 + $0x1c] sm:$0xf]
          %v553 = vld [vmem:[#allocation2 + $0x20] sm:$0xf]
          %v554 = vld [vmem:[#allocation2 + $0x24] sm:$0xf]
          %v555 = vld [vmem:[#allocation2 + $0x28] sm:$0xf]
          %v556 = vld [vmem:[#allocation2 + $0x2c] sm:$0xf]
          %v557 = vld [vmem:[#allocation2 + $0x30] sm:$0xf]
          %v558 = vld [vmem:[#allocation2 + $0x34] sm:$0xf]
          %v559 = vld [vmem:[#allocation2 + $0x38] sm:$0xf]
          %v560 = vld [vmem:[#allocation2 + $0x3c] sm:$0xf]
          %v561 = vld [vmem:[%s525] sm:$0x1]
          %v563 = vperm.slane %v561, 0
          %v567 = vunpack.c.l.b16 %v543
          %v568 = vunpack.c.l.b16 %v544
          %v569 = vpack.c.b16 %v568, %v567
          %v587 = vunpack.c.l.b16 %v545
          %v588 = vunpack.c.l.b16 %v546
          %v589 = vunpack.c.l.b16 %v547
          %v590 = vunpack.c.l.b16 %v548
          %v591 = vunpack.c.l.b16 %v549
          %v592 = vunpack.c.l.b16 %v550
          %v593 = vunpack.c.l.b16 %v551
          %v594 = vunpack.c.l.b16 %v552
          %v595 = vunpack.c.l.b16 %v553
          %v596 = vunpack.c.l.b16 %v554
          %v597 = vunpack.c.l.b16 %v555
          %v598 = vunpack.c.l.b16 %v556
          %v599 = vunpack.c.l.b16 %v557
          %v600 = vunpack.c.l.b16 %v558
          %v601 = vunpack.c.l.b16 %v559
          %v602 = vunpack.c.l.b16 %v560
          %v603 = vpack.c.b16 %v588, %v587
          %v604 = vpack.c.b16 %v590, %v589
          %v605 = vpack.c.b16 %v592, %v591
          %v606 = vpack.c.b16 %v594, %v593
          %v607 = vpack.c.b16 %v596, %v595
          %v608 = vpack.c.b16 %v598, %v597
          %v609 = vpack.c.b16 %v600, %v599
          %v610 = vpack.c.b16 %v602, %v601
          %619 = vmatpush.bf16.msra.mxu0 %v610
          %620 = vmatpush.bf16.msra.mxu0 %v609
          %621 = vmatpush.bf16.msra.mxu0 %v608
          %622 = vmatpush.bf16.msra.mxu0 %v607
          %623 = vmatpush.bf16.msra.mxu0 %v606
          %624 = vmatpush.bf16.msra.mxu0 %v605
          %625 = vmatpush.bf16.msra.mxu0 %v604
          %626 = vmatpush.bf16.msra.mxu0 %v603
          %627 = vmatmul.bf16.gmra.mxu0 %v569
          %v628 = vpop.f32.mrf.mxu0
          %v629 = vadd.f32 %v563, %v628
          %v630 = vpop.f32.mrf.mxu0
          %v631 = vadd.f32 %v563, %v630
          %632 = vdwg.mxu0
          %v633 = vmax.f32 %v629, 0.0
          %v634 = vmax.f32 %v631, 0.0
          %v635 = vpack.c.bf16 %v634, %v633
          %v636 = vld [vmem:[#allocation4] sm:$0xf]
          %v637 = vld [vmem:[#allocation4 + $0x4] sm:$0xf]
          %v638 = vld [vmem:[#allocation4 + $0x8] sm:$0xf]
          %v639 = vld [vmem:[#allocation4 + $0xc] sm:$0xf]
          %v640 = vld [vmem:[#allocation4 + $0x10] sm:$0xf]
          %v641 = vld [vmem:[#allocation4 + $0x14] sm:$0xf]
          %v642 = vld [vmem:[#allocation4 + $0x18] sm:$0xf]
          %v643 = vld [vmem:[#allocation4 + $0x1c] sm:$0xf]
          %v644 = vld [vmem:[#allocation4 + $0x20] sm:$0xf]
          %v645 = vld [vmem:[#allocation4 + $0x24] sm:$0xf]
          %v646 = vld [vmem:[#allocation4 + $0x28] sm:$0xf]
          %v647 = vld [vmem:[#allocation4 + $0x2c] sm:$0xf]
          %v648 = vld [vmem:[#allocation4 + $0x30] sm:$0xf]
          %v649 = vld [vmem:[#allocation4 + $0x34] sm:$0xf]
          %v650 = vld [vmem:[#allocation4 + $0x38] sm:$0xf]
          %v651 = vld [vmem:[#allocation4 + $0x3c] sm:$0xf]
          %v652 = vld [vmem:[%s528] sm:$0x1]
          %v654 = vperm.slane %v652, 0
          %v672 = vunpack.c.l.b16 %v636
          %v673 = vunpack.c.l.b16 %v637
          %v674 = vunpack.c.l.b16 %v638
          %v675 = vunpack.c.l.b16 %v639
          %v676 = vunpack.c.l.b16 %v640
          %v677 = vunpack.c.l.b16 %v641
          %v678 = vunpack.c.l.b16 %v642
          %v679 = vunpack.c.l.b16 %v643
          %v680 = vunpack.c.l.b16 %v644
          %v681 = vunpack.c.l.b16 %v645
          %v682 = vunpack.c.l.b16 %v646
          %v683 = vunpack.c.l.b16 %v647
          %v684 = vunpack.c.l.b16 %v648
          %v685 = vunpack.c.l.b16 %v649
          %v686 = vunpack.c.l.b16 %v650
          %v687 = vunpack.c.l.b16 %v651
          %v688 = vpack.c.b16 %v673, %v672
          %v689 = vpack.c.b16 %v675, %v674
          %v690 = vpack.c.b16 %v677, %v676
          %v691 = vpack.c.b16 %v679, %v678
          %v692 = vpack.c.b16 %v681, %v680
          %v693 = vpack.c.b16 %v683, %v682
          %v694 = vpack.c.b16 %v685, %v684
          %v695 = vpack.c.b16 %v687, %v686
          %704 = vmatpush.bf16.msra.mxu0 %v695
          %705 = vmatpush.bf16.msra.mxu0 %v694
          %706 = vmatpush.bf16.msra.mxu0 %v693
          %707 = vmatpush.bf16.msra.mxu0 %v692
          %708 = vmatpush.bf16.msra.mxu0 %v691
          %709 = vmatpush.bf16.msra.mxu0 %v690
          %710 = vmatpush.bf16.msra.mxu0 %v689
          %711 = vmatpush.bf16.msra.mxu0 %v688
          %712 = vmatmul.bf16.gmra.mxu0 %v635
          %v713 = vpop.f32.mrf.mxu0
          %v714 = vadd.f32 %v654, %v713
          %v715 = vpop.f32.mrf.mxu0
          %v716 = vadd.f32 %v654, %v715
          %717 = vdwg.mxu0
          %v718 = vpack.c.bf16 %v716, %v714
          %v719 = vld [vmem:[#allocation6] sm:$0xf]
          %v720 = vld [vmem:[#allocation6 + $0x4] sm:$0xf]
          %v721 = vld [vmem:[#allocation6 + $0x8] sm:$0xf]
          %v722 = vld [vmem:[#allocation6 + $0xc] sm:$0xf]
          %v723 = vld [vmem:[#allocation6 + $0x10] sm:$0xf]
          %v724 = vld [vmem:[#allocation6 + $0x14] sm:$0xf]
          %v725 = vld [vmem:[#allocation6 + $0x18] sm:$0xf]
          %v726 = vld [vmem:[#allocation6 + $0x1c] sm:$0xf]
          %v727 = vld [vmem:[#allocation6 + $0x20] sm:$0xf]
          %v728 = vld [vmem:[#allocation6 + $0x24] sm:$0xf]
          %v729 = vld [vmem:[#allocation6 + $0x28] sm:$0xf]
          %v730 = vld [vmem:[#allocation6 + $0x2c] sm:$0xf]
          %v731 = vld [vmem:[#allocation6 + $0x30] sm:$0xf]
          %v732 = vld [vmem:[#allocation6 + $0x34] sm:$0xf]
          %v733 = vld [vmem:[#allocation6 + $0x38] sm:$0xf]
          %v734 = vld [vmem:[#allocation6 + $0x3c] sm:$0xf]
          %v735 = vld [vmem:[%s7] sm:$0x1]
          %v737 = vperm.slane %v735, 0
          %v755 = vunpack.c.l.b16 %v719
          %v756 = vunpack.c.l.b16 %v720
          %v757 = vunpack.c.l.b16 %v721
          %v758 = vunpack.c.l.b16 %v722
          %v759 = vunpack.c.l.b16 %v723
          %v760 = vunpack.c.l.b16 %v724
          %v761 = vunpack.c.l.b16 %v725
          %v762 = vunpack.c.l.b16 %v726
          %v763 = vunpack.c.l.b16 %v727
          %v764 = vunpack.c.l.b16 %v728
          %v765 = vunpack.c.l.b16 %v729
          %v766 = vunpack.c.l.b16 %v730
          %v767 = vunpack.c.l.b16 %v731
          %v768 = vunpack.c.l.b16 %v732
          %v769 = vunpack.c.l.b16 %v733
          %v770 = vunpack.c.l.b16 %v734
          %v771 = vpack.c.b16 %v756, %v755
          %v772 = vpack.c.b16 %v758, %v757
          %v773 = vpack.c.b16 %v760, %v759
          %v774 = vpack.c.b16 %v762, %v761
          %v775 = vpack.c.b16 %v764, %v763
          %v776 = vpack.c.b16 %v766, %v765
          %v777 = vpack.c.b16 %v768, %v767
          %v778 = vpack.c.b16 %v770, %v769
          %787 = vmatpush.bf16.msra.mxu0 %v778
          %788 = vmatpush.bf16.msra.mxu0 %v777
          %789 = vmatpush.bf16.msra.mxu0 %v776
          %790 = vmatpush.bf16.msra.mxu0 %v775
          %791 = vmatpush.bf16.msra.mxu0 %v774
          %792 = vmatpush.bf16.msra.mxu0 %v773
          %793 = vmatpush.bf16.msra.mxu0 %v772
          %794 = vmatpush.bf16.msra.mxu0 %v771
          %795 = vmatmul.bf16.gmra.mxu0 %v718
          %v796 = vpop.f32.mrf.mxu0
          %v797 = vadd.f32 %v737, %v796
          %v798 = vpop.f32.mrf.mxu0
          %v799 = vadd.f32 %v737, %v798
          %800 = vdwg.mxu0
          %v801 = vmax.f32 %v797, 0.0
          %v802 = vmax.f32 %v799, 0.0
          %v803 = vpack.c.bf16 %v802, %v801
          %v804 = vld [vmem:[#allocation7] sm:$0xf]
          %v805 = vld [vmem:[#allocation7 + $0x4] sm:$0xf]
          %v806 = vld [vmem:[#allocation7 + $0x8] sm:$0xf]
          %v807 = vld [vmem:[#allocation7 + $0xc] sm:$0xf]
          %v808 = vld [vmem:[#allocation7 + $0x10] sm:$0xf]
          %v809 = vld [vmem:[#allocation7 + $0x14] sm:$0xf]
          %v810 = vld [vmem:[#allocation7 + $0x18] sm:$0xf]
          %v811 = vld [vmem:[#allocation7 + $0x1c] sm:$0xf]
          %v812 = vld [vmem:[#allocation7 + $0x20] sm:$0xf]
          %v813 = vld [vmem:[#allocation7 + $0x24] sm:$0xf]
          %v814 = vld [vmem:[#allocation7 + $0x28] sm:$0xf]
          %v815 = vld [vmem:[#allocation7 + $0x2c] sm:$0xf]
          %v816 = vld [vmem:[#allocation7 + $0x30] sm:$0xf]
          %v817 = vld [vmem:[#allocation7 + $0x34] sm:$0xf]
          %v818 = vld [vmem:[#allocation7 + $0x38] sm:$0xf]
          %v819 = vld [vmem:[#allocation7 + $0x3c] sm:$0xf]
          %v820 = vld [vmem:[%s9] sm:$0x1]
          %v822 = vperm.slane %v820, 0
          %v840 = vunpack.c.l.b16 %v804
          %v841 = vunpack.c.l.b16 %v805
          %v842 = vunpack.c.l.b16 %v806
          %v843 = vunpack.c.l.b16 %v807
          %v844 = vunpack.c.l.b16 %v808
          %v845 = vunpack.c.l.b16 %v809
          %v846 = vunpack.c.l.b16 %v810
          %v847 = vunpack.c.l.b16 %v811
          %v848 = vunpack.c.l.b16 %v812
          %v849 = vunpack.c.l.b16 %v813
          %v850 = vunpack.c.l.b16 %v814
          %v851 = vunpack.c.l.b16 %v815
          %v852 = vunpack.c.l.b16 %v816
          %v853 = vunpack.c.l.b16 %v817
          %v854 = vunpack.c.l.b16 %v818
          %v855 = vunpack.c.l.b16 %v819
          %v856 = vpack.c.b16 %v841, %v840
          %v857 = vpack.c.b16 %v843, %v842
          %v858 = vpack.c.b16 %v845, %v844
          %v859 = vpack.c.b16 %v847, %v846
          %v860 = vpack.c.b16 %v849, %v848
          %v861 = vpack.c.b16 %v851, %v850
          %v862 = vpack.c.b16 %v853, %v852
          %v863 = vpack.c.b16 %v855, %v854
          %872 = vmatpush.bf16.msra.mxu0 %v863
          %873 = vmatpush.bf16.msra.mxu0 %v862
          %874 = vmatpush.bf16.msra.mxu0 %v861
          %875 = vmatpush.bf16.msra.mxu0 %v860
          %876 = vmatpush.bf16.msra.mxu0 %v859
          %877 = vmatpush.bf16.msra.mxu0 %v858
          %878 = vmatpush.bf16.msra.mxu0 %v857
          %879 = vmatpush.bf16.msra.mxu0 %v856
          %880 = vmatmul.bf16.gmra.mxu0 %v803
          %v881 = vpop.f32.mrf.mxu0
          %v882 = vadd.f32 %v822, %v881
          %v883 = vpop.f32.mrf.mxu0
          %v884 = vadd.f32 %v822, %v883
          %885 = vdwg.mxu0
          %v886 = vpack.c.bf16 %v882, %v882
          %v887 = vpack.c.bf16 %v884, %v884
          %888 = vst [vmem:[%s537] sm:$0xf] %v886
          %889 = vst [vmem:[%s537 + $0x4] sm:$0xf] %v887
        $region80: #{blp_forward_pallas.1} parent=59 // pred_fallthru
          _
        %p890 = scmp.ne.s32.totalorder %s28, 0
        // Predicated region
        $region81: #{blp_forward_pallas.1} parent=59 // pred_check
          %p891 = pneg %p890
        $region82: #{blp_forward_pallas.1} parent=59 // pred_check_branch
          %893 = sbr.rel (%p891) target = $region84
        $region83: #{blp_forward_pallas.1} parent=59 // pred_region
          %v894 = vld [vmem:[%s520] sm:$0xf]
          %v895 = vld [vmem:[%s520 + $0x4] sm:$0xf]
          %v896 = vld [vmem:[#allocation2] sm:$0xf]
          %v897 = vld [vmem:[#allocation2 + $0x4] sm:$0xf]
          %v898 = vld [vmem:[#allocation2 + $0x8] sm:$0xf]
          %v899 = vld [vmem:[#allocation2 + $0xc] sm:$0xf]
          %v900 = vld [vmem:[#allocation2 + $0x10] sm:$0xf]
          %v901 = vld [vmem:[#allocation2 + $0x14] sm:$0xf]
          %v902 = vld [vmem:[#allocation2 + $0x18] sm:$0xf]
          %v903 = vld [vmem:[#allocation2 + $0x1c] sm:$0xf]
          %v904 = vld [vmem:[#allocation2 + $0x20] sm:$0xf]
          %v905 = vld [vmem:[#allocation2 + $0x24] sm:$0xf]
          %v906 = vld [vmem:[#allocation2 + $0x28] sm:$0xf]
          %v907 = vld [vmem:[#allocation2 + $0x2c] sm:$0xf]
          %v908 = vld [vmem:[#allocation2 + $0x30] sm:$0xf]
          %v909 = vld [vmem:[#allocation2 + $0x34] sm:$0xf]
          %v910 = vld [vmem:[#allocation2 + $0x38] sm:$0xf]
          %v911 = vld [vmem:[#allocation2 + $0x3c] sm:$0xf]
          %v912 = vld [vmem:[%s525] sm:$0x1]
          %v914 = vperm.slane %v912, 0
          %v918 = vunpack.c.l.b16 %v894
          %v919 = vunpack.c.l.b16 %v895
          %v920 = vpack.c.b16 %v919, %v918
          %v938 = vunpack.c.l.b16 %v896
          %v939 = vunpack.c.l.b16 %v897
          %v940 = vunpack.c.l.b16 %v898
          %v941 = vunpack.c.l.b16 %v899
          %v942 = vunpack.c.l.b16 %v900
          %v943 = vunpack.c.l.b16 %v901
          %v944 = vunpack.c.l.b16 %v902
          %v945 = vunpack.c.l.b16 %v903
          %v946 = vunpack.c.l.b16 %v904
          %v947 = vunpack.c.l.b16 %v905
          %v948 = vunpack.c.l.b16 %v906
          %v949 = vunpack.c.l.b16 %v907
          %v950 = vunpack.c.l.b16 %v908
          %v951 = vunpack.c.l.b16 %v909
          %v952 = vunpack.c.l.b16 %v910
          %v953 = vunpack.c.l.b16 %v911
          %v954 = vpack.c.b16 %v939, %v938
          %v955 = vpack.c.b16 %v941, %v940
          %v956 = vpack.c.b16 %v943, %v942
          %v957 = vpack.c.b16 %v945, %v944
          %v958 = vpack.c.b16 %v947, %v946
          %v959 = vpack.c.b16 %v949, %v948
          %v960 = vpack.c.b16 %v951, %v950
          %v961 = vpack.c.b16 %v953, %v952
          %970 = vmatpush.bf16.msra.mxu0 %v961
          %971 = vmatpush.bf16.msra.mxu0 %v960
          %972 = vmatpush.bf16.msra.mxu0 %v959
          %973 = vmatpush.bf16.msra.mxu0 %v958
          %974 = vmatpush.bf16.msra.mxu0 %v957
          %975 = vmatpush.bf16.msra.mxu0 %v956
          %976 = vmatpush.bf16.msra.mxu0 %v955
          %977 = vmatpush.bf16.msra.mxu0 %v954
          %978 = vmatmul.bf16.gmra.mxu0 %v920
          %v979 = vpop.f32.mrf.mxu0
          %v980 = vadd.f32 %v914, %v979
          %v981 = vpop.f32.mrf.mxu0
          %v982 = vadd.f32 %v914, %v981
          %983 = vdwg.mxu0
          %v984 = vmax.f32 %v980, 0.0
          %v985 = vmax.f32 %v982, 0.0
          %v986 = vpack.c.bf16 %v985, %v984
          %v987 = vld [vmem:[#allocation4] sm:$0xf]
          %v988 = vld [vmem:[#allocation4 + $0x4] sm:$0xf]
          %v989 = vld [vmem:[#allocation4 + $0x8] sm:$0xf]
          %v990 = vld [vmem:[#allocation4 + $0xc] sm:$0xf]
          %v991 = vld [vmem:[#allocation4 + $0x10] sm:$0xf]
          %v992 = vld [vmem:[#allocation4 + $0x14] sm:$0xf]
          %v993 = vld [vmem:[#allocation4 + $0x18] sm:$0xf]
          %v994 = vld [vmem:[#allocation4 + $0x1c] sm:$0xf]
          %v995 = vld [vmem:[#allocation4 + $0x20] sm:$0xf]
          %v996 = vld [vmem:[#allocation4 + $0x24] sm:$0xf]
          %v997 = vld [vmem:[#allocation4 + $0x28] sm:$0xf]
          %v998 = vld [vmem:[#allocation4 + $0x2c] sm:$0xf]
          %v999 = vld [vmem:[#allocation4 + $0x30] sm:$0xf]
          %v1000 = vld [vmem:[#allocation4 + $0x34] sm:$0xf]
          %v1001 = vld [vmem:[#allocation4 + $0x38] sm:$0xf]
          %v1002 = vld [vmem:[#allocation4 + $0x3c] sm:$0xf]
          %v1003 = vld [vmem:[%s528] sm:$0x1]
          %v1005 = vperm.slane %v1003, 0
          %v1023 = vunpack.c.l.b16 %v987
          %v1024 = vunpack.c.l.b16 %v988
          %v1025 = vunpack.c.l.b16 %v989
          %v1026 = vunpack.c.l.b16 %v990
          %v1027 = vunpack.c.l.b16 %v991
          %v1028 = vunpack.c.l.b16 %v992
          %v1029 = vunpack.c.l.b16 %v993
          %v1030 = vunpack.c.l.b16 %v994
          %v1031 = vunpack.c.l.b16 %v995
          %v1032 = vunpack.c.l.b16 %v996
          %v1033 = vunpack.c.l.b16 %v997
          %v1034 = vunpack.c.l.b16 %v998
          %v1035 = vunpack.c.l.b16 %v999
          %v1036 = vunpack.c.l.b16 %v1000
          %v1037 = vunpack.c.l.b16 %v1001
          %v1038 = vunpack.c.l.b16 %v1002
          %v1039 = vpack.c.b16 %v1024, %v1023
          %v1040 = vpack.c.b16 %v1026, %v1025
          %v1041 = vpack.c.b16 %v1028, %v1027
          %v1042 = vpack.c.b16 %v1030, %v1029
          %v1043 = vpack.c.b16 %v1032, %v1031
          %v1044 = vpack.c.b16 %v1034, %v1033
          %v1045 = vpack.c.b16 %v1036, %v1035
          %v1046 = vpack.c.b16 %v1038, %v1037
          %1055 = vmatpush.bf16.msra.mxu0 %v1046
          %1056 = vmatpush.bf16.msra.mxu0 %v1045
          %1057 = vmatpush.bf16.msra.mxu0 %v1044
          %1058 = vmatpush.bf16.msra.mxu0 %v1043
          %1059 = vmatpush.bf16.msra.mxu0 %v1042
          %1060 = vmatpush.bf16.msra.mxu0 %v1041
          %1061 = vmatpush.bf16.msra.mxu0 %v1040
          %1062 = vmatpush.bf16.msra.mxu0 %v1039
          %1063 = vmatmul.bf16.gmra.mxu0 %v986
          %v1064 = vpop.f32.mrf.mxu0
          %v1065 = vadd.f32 %v1005, %v1064
          %v1066 = vpop.f32.mrf.mxu0
          %v1067 = vadd.f32 %v1005, %v1066
          %1068 = vdwg.mxu0
          %v1069 = vpack.c.bf16 %v1065, %v1065
          %v1070 = vpack.c.bf16 %v1067, %v1067
          %1071 = vst [vmem:[%s537] sm:$0xf] %v1069
          %1072 = vst [vmem:[%s537 + $0x4] sm:$0xf] %v1070
        $region84: #{blp_forward_pallas.1} parent=59 // pred_fallthru
          _
        %s1073 = smul.u32 2, %s29
        %p1074 = scmp.lt.s32.totalorder %s28, 1
        %s1075 = scalar_select %p1074, %s28, 1
        %p1076 = scmp.lt.s32.totalorder %s1073, 1
        %s1077 = scalar_select %p1076, %s1073, 1
        %s1078 = smul.addr %s1075, 2
        %s1079 = sadd.s32 %s1077, %s1078
        %s1080 = smul.addr %s1079, 4
        %s1081 = scalar_lea.vmem %s10, %s1080
        // Predicated region
        $region85: #{blp_forward_pallas.1} parent=59 // pred_check
          %p1082 = pneg %p302
        $region86: #{blp_forward_pallas.1} parent=59 // pred_check_branch
          %1084 = sbr.rel (%p1082) target = $region88
        $region87: #{blp_forward_pallas.1} parent=59 // pred_region
          %s1085 = smul.u32 2, %s29
        $region88: #{blp_forward_pallas.1} parent=59 // pred_fallthru
          _
      $region60: #{blp_forward_pallas.1} parent=5 // pred_fallthru
        _
      %p1086 = scmp.le.s32.totalorder 2, %s19
      // Predicated region
      $region89: #{blp_forward_pallas.1} parent=5 // pred_check
        %p1087 = pneg %p1086
      $region90: #{blp_forward_pallas.1} parent=5 // pred_check_branch
        %1089 = sbr.rel (%p1087) target = $region92
      $region91: #{blp_forward_pallas.1} parent=5 // pred_region
        %s1090 = ssub.s32 %s19, 2
        // Predicated region
        $region93: #{blp_forward_pallas.1} parent=91 // pred_check
          %p1091 = pneg %p308
        $region94: #{blp_forward_pallas.1} parent=91 // pred_check_branch
          %1093 = sbr.rel (%p1091) target = $region96
        $region95: #{blp_forward_pallas.1} parent=91 // pred_region
          %s1094 = smul.u32 2, %s31
          %p1095 = scmp.lt.s32.totalorder %s30, 1
          %s1096 = scalar_select %p1095, %s30, 1
          %p1097 = scmp.lt.s32.totalorder %s1094, 1
          %s1098 = scalar_select %p1097, %s1094, 1
          %s1099 = smul.addr %s1096, 2
          %s1100 = sadd.s32 %s1098, %s1099
          %s1101 = smul.addr %s1100, 4
          %s1102 = scalar_lea.vmem %s10, %s1101
        $region96: #{blp_forward_pallas.1} parent=91 // pred_fallthru
          _
      $region92: #{blp_forward_pallas.1} parent=5 // pred_fallthru
        _
    $region6: #{blp_forward_pallas.1} parent=1 // loop_footer
      %s23 = sadd.s32 1, %s19
    $region7: #{blp_forward_pallas.1} parent=1 // loop_footer_branch
      %18 = sbr.rel target = $region3
    $region8: #{blp_forward_pallas.1} parent=1 // loop_exit
      _
    %1103 = vsyncpa [#allocation3], 1
    %s1104 = scalar_lea.sflag [#allocation3], 1
    %1105 = vsyncpa %s1104, 1
    %1106 = vsyncpa [#allocation5], 1
    %1107 = vsyncpa [#allocation8], 1

// kernel: blp_forward_pallas.1
$region0: #{blp_forward_pallas.1}
  #allocation0 [shape = 'u32[]', space=smem, size = 0x4, offset = 0x4, fixed_abs, tag = 'smem constant byte address 0x4 - core index']
  #allocation1 [shape = 'u32[72,128]{1,0:T(1,128)}', space=vmem, size = 0x9000, scoped, tag = 'internal scratch']
  %s0 = inlined_call_operand.vmem [shape: bf16[16,128], index: 0, kind: input, shape index: {}]
  %s1 = inlined_call_operand.vmem [shape: bf16[16,128], index: 1, kind: input, shape index: {}]
  %s2 = inlined_call_operand.hbm [shape: bf16[2,128,128], index: 2, kind: input, shape index: {}]
  %s3 = inlined_call_operand.vmem [shape: f32[2,1,128], index: 3, kind: input, shape index: {}]
  %s4 = inlined_call_operand.hbm [shape: bf16[2,128,128], index: 4, kind: input, shape index: {}]
  %s5 = inlined_call_operand.vmem [shape: f32[2,1,128], index: 5, kind: input, shape index: {}]
  %s6 = inlined_call_operand.hbm [shape: bf16[128,128], index: 6, kind: input, shape index: {}]
  %s7 = inlined_call_operand.vmem [shape: f32[1,128], index: 7, kind: input, shape index: {}]
  %s8 = inlined_call_operand.hbm [shape: bf16[128,128], index: 8, kind: input, shape index: {}]
  %s9 = inlined_call_operand.vmem [shape: f32[1,128], index: 9, kind: input, shape index: {}]
  %s10 = inlined_call_operand.vmem [shape: bf16[2,16,128], index: 10, kind: output, shape index: {}]
  %s11 = sld [smem:[#allocation0]]
  $region97: #{blp_forward_pallas.1} parent=0
    _
  %s13 = ssub.s32 1, %s11
  %s14 = scalar_select 0, %s13, %s11
  $region1: #{blp_forward_pallas.1} parent=0
    #allocation2 [shape = 'u8[65536]{0}', space=vmem, size = 0x10000, scoped, tag = 'input window, operand 2']
    #allocation3 [shape = 's32[2]{0}', space=sflag, size = 0x8, scoped, tag = 'scoped memory for blp_forward_pallas.1']
    #allocation4 [shape = 'u8[65536]{0}', space=vmem, size = 0x10000, scoped, tag = 'input window, operand 4']
    #allocation5 [shape = 's32[2]{0}', space=sflag, size = 0x8, scoped, tag = 'scoped memory for blp_forward_pallas.1']
    #allocation6 [shape = 'u8[32768]{0}', space=vmem, size = 0x8000, scoped, tag = 'input window, operand 6, single buffered']
    #allocation7 [shape = 'u8[32768]{0}', space=vmem, size = 0x8000, scoped, tag = 'input window, operand 8, single buffered']
    #allocation8 [shape = 's32[1]{0}', space=sflag, size = 0x4, scoped, tag = 'scoped memory for blp_forward_pallas.1']
    %15 = vsyncpa [#allocation3], 0
    %s16 = scalar_lea.sflag [#allocation3], 1
    %17 = vsyncpa %s16, 0
    %18 = vsyncpa [#allocation5], 0
    %s19 = scalar_lea.sflag [#allocation5], 1
    %20 = vsyncpa %s19, 0
    %21 = vsyncpa [#allocation8], 0
    loop: start=0, step=1, limit=4
    $region2: #{blp_forward_pallas.1} parent=1 // loop_pre_header
      _
    $region3: #{blp_forward_pallas.1} parent=1 // loop_header
      %s23 = sphi 0, %s27
      %p24 = scmp.ge.s32.totalorder %s23, 4
      %s30 = sphi 0, %s42
      %s31 = sphi 0, %s38
      %s32 = sphi 0, %s30
      %s33 = sphi 0, %s31
      %s34 = sphi 0, %s32
      %s35 = sphi 0, %s33
      %s49 = sphi 0, %s51
      %s52 = sphi 0, %s49
      %s53 = sphi 0, %s52
      %s69 = sphi 0, %s53
      %s77 = sphi 0, %s79
      %s80 = sphi 0, %s77
      %s81 = sphi 0, %s80
      %s97 = sphi 0, %s81
      %s103 = sphi 0, %s105
      %s106 = sphi 0, %s103
      %s107 = sphi 0, %s106
      %s123 = sphi 0, %s107
      %s129 = sphi 0, %s131
      %s132 = sphi 0, %s129
      %s133 = sphi 0, %s132
      %s149 = sphi 0, %s133
      %s155 = sphi 0, %s157
      %s158 = sphi 0, %s155
      %s159 = sphi 0, %s158
      %s175 = sphi 0, %s159
      %s181 = sphi 0, %s183
      %s184 = sphi 0, %s181
      %s185 = sphi 0, %s184
      %s201 = sphi 0, %s185
      %s205 = sphi 0, %s205
      %s207 = sphi 0, %s205
      %s208 = sphi 0, %s207
      %s222 = sphi 0, %s208
      %s226 = sphi 0, %s226
      %s228 = sphi 0, %s226
      %s229 = sphi 0, %s228
      %s243 = sphi 0, %s229
      %s247 = sphi 0, %s247
      %s249 = sphi 0, %s247
      %s250 = sphi 0, %s249
      %s264 = sphi 0, %s250
      %s268 = sphi 0, %s268
      %s270 = sphi 0, %s268
      %s271 = sphi 0, %s270
      %s285 = sphi 0, %s271
      %s293 = sphi 0, %s295
      %s296 = sphi 0, %s293
      %s297 = sphi 0, %s296
      %s313 = sphi 0, %s297
    $region4: #{blp_forward_pallas.1} parent=1 // loop_header_branch
      %26 = sbr.rel (%p24) target = $region8
    $region5: #{blp_forward_pallas.1} parent=1 // loop_body
      %s28 = ssub.s32 %s23, 1
      %s29 = ssub.s32 %s23, 2
      %s36 = sadd.s32 1, %s31
      %p37 = scmp.ge.s32.totalorder %s36, 1
      %s38 = scalar_select %p37, 0, %s36
      %s39 = sadd.s32 1, %s30
      %s40 = scalar_select %p37, %s39, %s30
      %p41 = scmp.ge.s32.totalorder %s40, 2
      %s42 = scalar_select %p41, 0, %s40
      %s43 = ssub.s32 1, %s30
      %s44 = smul.u32 %s31, %s43
      %s45 = ssub.s32 1, %s42
      %s46 = smul.u32 %s38, %s45
      %s47 = ssub.s32 %s44, %s46
      %p48 = scmp.eq.s32.totalorder %s47, 0
      %s50 = sadd.s32 %s49, 1
      %s51 = scalar_select %p48, %s49, %s50
      %p54 = pneg %p48
      %p55 = scmp.eq.s32.totalorder %s23, 1
      %p56 = por %p54, %p55
      %p57 = scmp.ne.s32.totalorder %s49, %s52
      %p58 = scmp.eq.s32.totalorder %s23, 0
      %p59 = por %p57, %p58
      %p60 = scmp.ne.s32.totalorder %s49, %s52
      %p61 = scmp.eq.s32.totalorder %s28, 1
      %p62 = por %p60, %p61
      %p63 = scmp.ne.s32.totalorder %s52, %s53
      %p64 = scmp.eq.s32.totalorder %s28, 0
      %p65 = por %p63, %p64
      %p66 = scmp.ne.s32.totalorder %s52, %s53
      %p67 = scmp.eq.s32.totalorder %s29, 1
      %p68 = por %p66, %p67
      %p70 = scmp.ne.s32.totalorder %s53, %s69
      %p71 = scmp.eq.s32.totalorder %s29, 0
      %p72 = por %p70, %p71
      %s73 = smul.u32 %s31, %s30
      %s74 = smul.u32 %s38, %s42
      %s75 = ssub.s32 %s73, %s74
      %p76 = scmp.eq.s32.totalorder %s75, 0
      %s78 = sadd.s32 %s77, 1
      %s79 = scalar_select %p76, %s77, %s78
      %p82 = pneg %p76
      %p83 = scmp.eq.s32.totalorder %s23, 1
      %p84 = por %p82, %p83
      %p85 = scmp.ne.s32.totalorder %s77, %s80
      %p86 = scmp.eq.s32.totalorder %s23, 0
      %p87 = por %p85, %p86
      %p88 = scmp.ne.s32.totalorder %s77, %s80
      %p89 = scmp.eq.s32.totalorder %s28, 1
      %p90 = por %p88, %p89
      %p91 = scmp.ne.s32.totalorder %s80, %s81
      %p92 = scmp.eq.s32.totalorder %s28, 0
      %p93 = por %p91, %p92
      %p94 = scmp.ne.s32.totalorder %s80, %s81
      %p95 = scmp.eq.s32.totalorder %s29, 1
      %p96 = por %p94, %p95
      %p98 = scmp.ne.s32.totalorder %s81, %s97
      %p99 = scmp.eq.s32.totalorder %s29, 0
      %p100 = por %p98, %p99
      %s101 = ssub.s32 %s30, %s42
      %p102 = scmp.eq.s32.totalorder %s101, 0
      %s104 = sadd.s32 %s103, 1
      %s105 = scalar_select %p102, %s103, %s104
      %p108 = pneg %p102
      %p109 = scmp.eq.s32.totalorder %s23, 1
      %p110 = por %p108, %p109
      %p111 = scmp.ne.s32.totalorder %s103, %s106
      %p112 = scmp.eq.s32.totalorder %s23, 0
      %p113 = por %p111, %p112
      %p114 = scmp.ne.s32.totalorder %s103, %s106
      %p115 = scmp.eq.s32.totalorder %s28, 1
      %p116 = por %p114, %p115
      %p117 = scmp.ne.s32.totalorder %s106, %s107
      %p118 = scmp.eq.s32.totalorder %s28, 0
      %p119 = por %p117, %p118
      %p120 = scmp.ne.s32.totalorder %s106, %s107
      %p121 = scmp.eq.s32.totalorder %s29, 1
      %p122 = por %p120, %p121
      %p124 = scmp.ne.s32.totalorder %s107, %s123
      %p125 = scmp.eq.s32.totalorder %s29, 0
      %p126 = por %p124, %p125
      %s127 = ssub.s32 %s30, %s42
      %p128 = scmp.eq.s32.totalorder %s127, 0
      %s130 = sadd.s32 %s129, 1
      %s131 = scalar_select %p128, %s129, %s130
      %p134 = pneg %p128
      %p135 = scmp.eq.s32.totalorder %s23, 1
      %p136 = por %p134, %p135
      %p137 = scmp.ne.s32.totalorder %s129, %s132
      %p138 = scmp.eq.s32.totalorder %s23, 0
      %p139 = por %p137, %p138
      %p140 = scmp.ne.s32.totalorder %s129, %s132
      %p141 = scmp.eq.s32.totalorder %s28, 1
      %p142 = por %p140, %p141
      %p143 = scmp.ne.s32.totalorder %s132, %s133
      %p144 = scmp.eq.s32.totalorder %s28, 0
      %p145 = por %p143, %p144
      %p146 = scmp.ne.s32.totalorder %s132, %s133
      %p147 = scmp.eq.s32.totalorder %s29, 1
      %p148 = por %p146, %p147
      %p150 = scmp.ne.s32.totalorder %s133, %s149
      %p151 = scmp.eq.s32.totalorder %s29, 0
      %p152 = por %p150, %p151
      %s153 = ssub.s32 %s30, %s42
      %p154 = scmp.eq.s32.totalorder %s153, 0
      %s156 = sadd.s32 %s155, 1
      %s157 = scalar_select %p154, %s155, %s156
      %p160 = pneg %p154
      %p161 = scmp.eq.s32.totalorder %s23, 1
      %p162 = por %p160, %p161
      %p163 = scmp.ne.s32.totalorder %s155, %s158
      %p164 = scmp.eq.s32.totalorder %s23, 0
      %p165 = por %p163, %p164
      %p166 = scmp.ne.s32.totalorder %s155, %s158
      %p167 = scmp.eq.s32.totalorder %s28, 1
      %p168 = por %p166, %p167
      %p169 = scmp.ne.s32.totalorder %s158, %s159
      %p170 = scmp.eq.s32.totalorder %s28, 0
      %p171 = por %p169, %p170
      %p172 = scmp.ne.s32.totalorder %s158, %s159
      %p173 = scmp.eq.s32.totalorder %s29, 1
      %p174 = por %p172, %p173
      %p176 = scmp.ne.s32.totalorder %s159, %s175
      %p177 = scmp.eq.s32.totalorder %s29, 0
      %p178 = por %p176, %p177
      %s179 = ssub.s32 %s30, %s42
      %p180 = scmp.eq.s32.totalorder %s179, 0
      %s182 = sadd.s32 %s181, 1
      %s183 = scalar_select %p180, %s181, %s182
      %p186 = pneg %p180
      %p187 = scmp.eq.s32.totalorder %s23, 1
      %p188 = por %p186, %p187
      %p189 = scmp.ne.s32.totalorder %s181, %s184
      %p190 = scmp.eq.s32.totalorder %s23, 0
      %p191 = por %p189, %p190
      %p192 = scmp.ne.s32.totalorder %s181, %s184
      %p193 = scmp.eq.s32.totalorder %s28, 1
      %p194 = por %p192, %p193
      %p195 = scmp.ne.s32.totalorder %s184, %s185
      %p196 = scmp.eq.s32.totalorder %s28, 0
      %p197 = por %p195, %p196
      %p198 = scmp.ne.s32.totalorder %s184, %s185
      %p199 = scmp.eq.s32.totalorder %s29, 1
      %p200 = por %p198, %p199
      %p202 = scmp.ne.s32.totalorder %s185, %s201
      %p203 = scmp.eq.s32.totalorder %s29, 0
      %p204 = por %p202, %p203
      %s206 = sadd.s32 %s205, 1
      %p209 = scmp.eq.s32.totalorder %s23, 1
      %p210 = scmp.ne.s32.totalorder %s205, %s207
      %p211 = scmp.eq.s32.totalorder %s23, 0
      %p212 = por %p210, %p211
      %p213 = scmp.ne.s32.totalorder %s205, %s207
      %p214 = scmp.eq.s32.totalorder %s28, 1
      %p215 = por %p213, %p214
      %p216 = scmp.ne.s32.totalorder %s207, %s208
      %p217 = scmp.eq.s32.totalorder %s28, 0
      %p218 = por %p216, %p217
      %p219 = scmp.ne.s32.totalorder %s207, %s208
      %p220 = scmp.eq.s32.totalorder %s29, 1
      %p221 = por %p219, %p220
      %p223 = scmp.ne.s32.totalorder %s208, %s222
      %p224 = scmp.eq.s32.totalorder %s29, 0
      %p225 = por %p223, %p224
      %s227 = sadd.s32 %s226, 1
      %p230 = scmp.eq.s32.totalorder %s23, 1
      %p231 = scmp.ne.s32.totalorder %s226, %s228
      %p232 = scmp.eq.s32.totalorder %s23, 0
      %p233 = por %p231, %p232
      %p234 = scmp.ne.s32.totalorder %s226, %s228
      %p235 = scmp.eq.s32.totalorder %s28, 1
      %p236 = por %p234, %p235
      %p237 = scmp.ne.s32.totalorder %s228, %s229
      %p238 = scmp.eq.s32.totalorder %s28, 0
      %p239 = por %p237, %p238
      %p240 = scmp.ne.s32.totalorder %s228, %s229
      %p241 = scmp.eq.s32.totalorder %s29, 1
      %p242 = por %p240, %p241
      %p244 = scmp.ne.s32.totalorder %s229, %s243
      %p245 = scmp.eq.s32.totalorder %s29, 0
      %p246 = por %p244, %p245
      %s248 = sadd.s32 %s247, 1
      %p251 = scmp.eq.s32.totalorder %s23, 1
      %p252 = scmp.ne.s32.totalorder %s247, %s249
      %p253 = scmp.eq.s32.totalorder %s23, 0
      %p254 = por %p252, %p253
      %p255 = scmp.ne.s32.totalorder %s247, %s249
      %p256 = scmp.eq.s32.totalorder %s28, 1
      %p257 = por %p255, %p256
      %p258 = scmp.ne.s32.totalorder %s249, %s250
      %p259 = scmp.eq.s32.totalorder %s28, 0
      %p260 = por %p258, %p259
      %p261 = scmp.ne.s32.totalorder %s249, %s250
      %p262 = scmp.eq.s32.totalorder %s29, 1
      %p263 = por %p261, %p262
      %p265 = scmp.ne.s32.totalorder %s250, %s264
      %p266 = scmp.eq.s32.totalorder %s29, 0
      %p267 = por %p265, %p266
      %s269 = sadd.s32 %s268, 1
      %p272 = scmp.eq.s32.totalorder %s23, 1
      %p273 = scmp.ne.s32.totalorder %s268, %s270
      %p274 = scmp.eq.s32.totalorder %s23, 0
      %p275 = por %p273, %p274
      %p276 = scmp.ne.s32.totalorder %s268, %s270
      %p277 = scmp.eq.s32.totalorder %s28, 1
      %p278 = por %p276, %p277
      %p279 = scmp.ne.s32.totalorder %s270, %s271
      %p280 = scmp.eq.s32.totalorder %s28, 0
      %p281 = por %p279, %p280
      %p282 = scmp.ne.s32.totalorder %s270, %s271
      %p283 = scmp.eq.s32.totalorder %s29, 1
      %p284 = por %p282, %p283
      %p286 = scmp.ne.s32.totalorder %s271, %s285
      %p287 = scmp.eq.s32.totalorder %s29, 0
      %p288 = por %p286, %p287
      %s289 = ssub.s32 %s30, %s42
      %s290 = ssub.s32 %s31, %s38
      %s291 = sor.u32 %s289, %s290
      %p292 = scmp.eq.s32.totalorder %s291, 0
      %s294 = sadd.s32 %s293, 1
      %s295 = scalar_select %p292, %s293, %s294
      %p298 = pneg %p292
      %p299 = scmp.eq.s32.totalorder %s23, 1
      %p300 = por %p298, %p299
      %p301 = scmp.ne.s32.totalorder %s293, %s296
      %p302 = scmp.eq.s32.totalorder %s23, 0
      %p303 = por %p301, %p302
      %p304 = scmp.ne.s32.totalorder %s293, %s296
      %p305 = scmp.eq.s32.totalorder %s28, 1
      %p306 = por %p304, %p305
      %p307 = scmp.ne.s32.totalorder %s296, %s297
      %p308 = scmp.eq.s32.totalorder %s28, 0
      %p309 = por %p307, %p308
      %p310 = scmp.ne.s32.totalorder %s296, %s297
      %p311 = scmp.eq.s32.totalorder %s29, 1
      %p312 = por %p310, %p311
      %p314 = scmp.ne.s32.totalorder %s297, %s313
      %p315 = scmp.eq.s32.totalorder %s29, 0
      %p316 = por %p314, %p315
      %p317 = scmp.le.s32.totalorder 1, %s23
      %p318 = scmp.lt.s32.totalorder %s23, 3
      %p319 = pnand %p317, %p318
      %p320 = pneg %p319
      // Predicated region
      $region9: #{blp_forward_pallas.1} parent=5 // pred_check
        _
      $region10: #{blp_forward_pallas.1} parent=5 // pred_check_branch
        %322 = sbr.rel (%p319) target = $region12
      $region11: #{blp_forward_pallas.1} parent=5 // pred_region
        %s323 = ssub.s32 %s23, 1
        // Predicated region
        $region13: #{blp_forward_pallas.1} parent=11 // pred_check
          %p324 = pneg %p218
        $region14: #{blp_forward_pallas.1} parent=11 // pred_check_branch
          %326 = sbr.rel (%p324) target = $region16
        $region15: #{blp_forward_pallas.1} parent=11 // pred_region
          %328 = vsyncadd [#allocation5], 0
          %s329 = sshll.u32 %s6, 4
          %s330 = int_to_ptr.hbm [resolvable:$true] %s329
          %s331 = sshll.u32 [#allocation6], 4
          %s332 = int_to_ptr.vmem [resolvable:$true] %s331
          %337 = dma.hbm_to_vmem [thread:$0]  %s330, 1024, %s332, [#allocation5], 64, 64, 4
        $region16: #{blp_forward_pallas.1} parent=11 // pred_fallthru
          _
        // Predicated region
        $region17: #{blp_forward_pallas.1} parent=11 // pred_check
          %p338 = pneg %p239
        $region18: #{blp_forward_pallas.1} parent=11 // pred_check_branch
          %340 = sbr.rel (%p338) target = $region20
        $region19: #{blp_forward_pallas.1} parent=11 // pred_region
          _
        $region20: #{blp_forward_pallas.1} parent=11 // pred_fallthru
          _
        // Predicated region
        $region21: #{blp_forward_pallas.1} parent=11 // pred_check
          %p341 = pneg %p260
        $region22: #{blp_forward_pallas.1} parent=11 // pred_check_branch
          %343 = sbr.rel (%p341) target = $region24
        $region23: #{blp_forward_pallas.1} parent=11 // pred_region
          %345 = vsyncadd [#allocation8], 0
          %s346 = sshll.u32 %s8, 4
          %s347 = int_to_ptr.hbm [resolvable:$true] %s346
          %s348 = sshll.u32 [#allocation7], 4
          %s349 = int_to_ptr.vmem [resolvable:$true] %s348
          %354 = dma.hbm_to_vmem [thread:$0]  %s347, 1024, %s349, [#allocation8], 64, 64, 4
        $region24: #{blp_forward_pallas.1} parent=11 // pred_fallthru
          _
        // Predicated region
        $region25: #{blp_forward_pallas.1} parent=11 // pred_check
          %p355 = pneg %p281
        $region26: #{blp_forward_pallas.1} parent=11 // pred_check_branch
          %357 = sbr.rel (%p355) target = $region28
        $region27: #{blp_forward_pallas.1} parent=11 // pred_region
          _
        $region28: #{blp_forward_pallas.1} parent=11 // pred_fallthru
          _
      $region12: #{blp_forward_pallas.1} parent=5 // pred_fallthru
        _
      %p358 = scmp.lt.s32.totalorder %s23, 2
      // Predicated region
      $region29: #{blp_forward_pallas.1} parent=5 // pred_check
        %p359 = pneg %p358
      $region30: #{blp_forward_pallas.1} parent=5 // pred_check_branch
        %361 = sbr.rel (%p359) target = $region32
      $region31: #{blp_forward_pallas.1} parent=5 // pred_region
        // Predicated region
        $region33: #{blp_forward_pallas.1} parent=31 // pred_check
          %p362 = pneg %p59
        $region34: #{blp_forward_pallas.1} parent=31 // pred_check_branch
          %364 = sbr.rel (%p362) target = $region36
        $region35: #{blp_forward_pallas.1} parent=31 // pred_region
          %s365 = ssub.s32 1, %s30
          %s366 = smul.u32 %s31, %s365
          %s367 = smul.u32 2, %s366
          %p368 = scmp.lt.s32.totalorder %s367, 1
          %s369 = scalar_select %p368, %s367, 1
          %s370 = smul.addr %s369, 4
          %s371 = scalar_lea.vmem %s0, %s370
          %s372 = ssub.s32 1, %s30
          %s373 = smul.u32 %s31, %s372
          %s374 = smul.u32 2, %s373
        $region36: #{blp_forward_pallas.1} parent=31 // pred_fallthru
          _
        // Predicated region
        $region37: #{blp_forward_pallas.1} parent=31 // pred_check
          %p375 = pneg %p87
        $region38: #{blp_forward_pallas.1} parent=31 // pred_check_branch
          %377 = sbr.rel (%p375) target = $region40
        $region39: #{blp_forward_pallas.1} parent=31 // pred_region
          %s378 = smul.u32 %s31, %s30
          %s379 = smul.u32 2, %s378
          %p380 = scmp.lt.s32.totalorder %s379, 1
          %s381 = scalar_select %p380, %s379, 1
          %s382 = smul.addr %s381, 4
          %s383 = scalar_lea.vmem %s1, %s382
          %s384 = smul.u32 %s31, %s30
          %s385 = smul.u32 2, %s384
        $region40: #{blp_forward_pallas.1} parent=31 // pred_fallthru
          _
        // Predicated region
        $region41: #{blp_forward_pallas.1} parent=31 // pred_check
          %p386 = pneg %p113
        $region42: #{blp_forward_pallas.1} parent=31 // pred_check_branch
          %388 = sbr.rel (%p386) target = $region44
        $region43: #{blp_forward_pallas.1} parent=31 // pred_region
          %s389 = sand.u32 %s103, 1
          %s390 = scalar_lea.sflag [#allocation3], %s389
          %s391 = sand.u32 %s103, 1
          %s392 = smul.addr %s391, 64
          %s393 = scalar_lea.vmem [#allocation2], %s392
          %395 = vsyncadd %s390, 0
          %s396 = smul.addr %s30, 16
          %s397 = smul.addr %s396, 4
          %s398 = scalar_lea.hbm %s2, %s397
          %s399 = sshll.u32 %s398, 4
          %s400 = int_to_ptr.hbm [resolvable:$true] %s399
          %s401 = sshll.u32 %s393, 4
          %s402 = int_to_ptr.vmem [resolvable:$true] %s401
          %407 = dma.hbm_to_vmem [thread:$0]  %s400, 1024, %s402, %s390, 64, 64, 4
        $region44: #{blp_forward_pallas.1} parent=31 // pred_fallthru
          _
        // Predicated region
        $region45: #{blp_forward_pallas.1} parent=31 // pred_check
          %p408 = pneg %p139
        $region46: #{blp_forward_pallas.1} parent=31 // pred_check_branch
          %410 = sbr.rel (%p408) target = $region48
        $region47: #{blp_forward_pallas.1} parent=31 // pred_region
          %p411 = scmp.lt.s32.totalorder %s30, 1
          %s412 = scalar_select %p411, %s30, 1
          %s413 = scalar_lea.vmem %s3, %s412
        $region48: #{blp_forward_pallas.1} parent=31 // pred_fallthru
          _
        // Predicated region
        $region49: #{blp_forward_pallas.1} parent=31 // pred_check
          %p414 = pneg %p165
        $region50: #{blp_forward_pallas.1} parent=31 // pred_check_branch
          %416 = sbr.rel (%p414) target = $region52
        $region51: #{blp_forward_pallas.1} parent=31 // pred_region
          %s417 = sand.u32 %s23, 1
          %s418 = scalar_lea.sflag [#allocation5], %s417
          %s419 = sand.u32 %s155, 1
          %s420 = smul.addr %s419, 64
          %s421 = scalar_lea.vmem [#allocation4], %s420
          %423 = vsyncadd %s418, 0
          %s424 = smul.addr %s30, 16
          %s425 = smul.addr %s424, 4
          %s426 = scalar_lea.hbm %s4, %s425
          %s427 = sshll.u32 %s426, 4
          %s428 = int_to_ptr.hbm [resolvable:$true] %s427
          %s429 = sshll.u32 %s421, 4
          %s430 = int_to_ptr.vmem [resolvable:$true] %s429
          %435 = dma.hbm_to_vmem [thread:$0]  %s428, 1024, %s430, %s418, 64, 64, 4
        $region52: #{blp_forward_pallas.1} parent=31 // pred_fallthru
          _
        // Predicated region
        $region53: #{blp_forward_pallas.1} parent=31 // pred_check
          %p436 = pneg %p191
        $region54: #{blp_forward_pallas.1} parent=31 // pred_check_branch
          %438 = sbr.rel (%p436) target = $region56
        $region55: #{blp_forward_pallas.1} parent=31 // pred_region
          %p439 = scmp.lt.s32.totalorder %s30, 1
          %s440 = scalar_select %p439, %s30, 1
          %s441 = scalar_lea.vmem %s5, %s440
        $region56: #{blp_forward_pallas.1} parent=31 // pred_fallthru
          _
      $region32: #{blp_forward_pallas.1} parent=5 // pred_fallthru
        _
      %p442 = scmp.le.s32.totalorder 1, %s23
      %p443 = scmp.lt.s32.totalorder %s23, 3
      %p444 = pnand %p442, %p443
      %p445 = pneg %p444
      // Predicated region
      $region57: #{blp_forward_pallas.1} parent=5 // pred_check
        _
      $region58: #{blp_forward_pallas.1} parent=5 // pred_check_branch
        %447 = sbr.rel (%p444) target = $region60
      $region59: #{blp_forward_pallas.1} parent=5 // pred_region
        %s448 = ssub.s32 %s23, 1
        %s449 = sand.u32 %s106, 1
        %s450 = scalar_lea.sflag [#allocation3], %s449
        %s451 = sand.u32 %s106, 1
        %s452 = smul.addr %s451, 64
        %s453 = scalar_lea.vmem [#allocation2], %s452
        // Predicated region
        $region61: #{blp_forward_pallas.1} parent=59 // pred_check
          %p454 = pneg %p119
        $region62: #{blp_forward_pallas.1} parent=59 // pred_check_branch
          %456 = sbr.rel (%p454) target = $region64
        $region63: #{blp_forward_pallas.1} parent=59 // pred_region
          %458 = dma.done %s450, 1024
        $region64: #{blp_forward_pallas.1} parent=59 // pred_fallthru
          _
        %s459 = sand.u32 %s28, 1
        %s460 = scalar_lea.sflag [#allocation5], %s459
        %s461 = sand.u32 %s158, 1
        %s462 = smul.addr %s461, 64
        %s463 = scalar_lea.vmem [#allocation4], %s462
        // Predicated region
        $region65: #{blp_forward_pallas.1} parent=59 // pred_check
          %p464 = pneg %p171
        $region66: #{blp_forward_pallas.1} parent=59 // pred_check_branch
          %466 = sbr.rel (%p464) target = $region68
        $region67: #{blp_forward_pallas.1} parent=59 // pred_region
          %468 = dma.done %s460, 1024
        $region68: #{blp_forward_pallas.1} parent=59 // pred_fallthru
          _
        // Predicated region
        $region69: #{blp_forward_pallas.1} parent=59 // pred_check
          %p469 = pneg %p218
        $region70: #{blp_forward_pallas.1} parent=59 // pred_check_branch
          %471 = sbr.rel (%p469) target = $region72
        $region71: #{blp_forward_pallas.1} parent=59 // pred_region
          %473 = dma.done [#allocation5], 1024
        $region72: #{blp_forward_pallas.1} parent=59 // pred_fallthru
          _
        // Predicated region
        $region73: #{blp_forward_pallas.1} parent=59 // pred_check
          %p474 = pneg %p260
        $region74: #{blp_forward_pallas.1} parent=59 // pred_check_branch
          %476 = sbr.rel (%p474) target = $region76
        $region75: #{blp_forward_pallas.1} parent=59 // pred_region
          %478 = dma.done [#allocation8], 1024
        $region76: #{blp_forward_pallas.1} parent=59 // pred_fallthru
          _
        %s479 = ssub.s32 1, %s32
        %s480 = smul.u32 %s33, %s479
        %s481 = smul.u32 2, %s480
        %p482 = scmp.lt.s32.totalorder %s481, 1
        %s483 = scalar_select %p482, %s481, 1
        %s484 = smul.addr %s483, 4
        %s485 = scalar_lea.vmem %s0, %s484
        %p486 = pneg %p65
        %p487 = pneg %p62
        %s488 = smul.u32 %s33, %s32
        %s489 = smul.u32 2, %s488
        %p490 = scmp.lt.s32.totalorder %s489, 1
        %s491 = scalar_select %p490, %s489, 1
        %s492 = smul.addr %s491, 4
        %s493 = scalar_lea.vmem %s1, %s492
        %p494 = pneg %p93
        %p495 = pneg %p90
        %s496 = sand.u32 %s106, 1
        %s497 = scalar_lea.sflag [#allocation3], %s496
        %s498 = sand.u32 %s106, 1
        %s499 = smul.addr %s498, 64
        %s500 = scalar_lea.vmem [#allocation2], %s499
        %p501 = pneg %p119
        %p502 = pneg %p116
        %p503 = scmp.lt.s32.totalorder %s32, 1
        %s504 = scalar_select %p503, %s32, 1
        %s505 = scalar_lea.vmem %s3, %s504
        %p506 = pneg %p145
        %p507 = pneg %p142
        %s508 = sand.u32 %s28, 1
        %s509 = scalar_lea.sflag [#allocation5], %s508
        %s510 = sand.u32 %s158, 1
        %s511 = smul.addr %s510, 64
        %s512 = scalar_lea.vmem [#allocation4], %s511
        %p513 = pneg %p171
        %p514 = pneg %p168
        %p515 = scmp.lt.s32.totalorder %s32, 1
        %s516 = scalar_select %p515, %s32, 1
        %s517 = scalar_lea.vmem %s5, %s516
        %p518 = pneg %p197
        %p519 = pneg %p194
        %p520 = pneg %p218
        %p521 = pneg %p215
        %p522 = pneg %p239
        %p523 = pneg %p236
        %p524 = pneg %p260
        %p525 = pneg %p257
        %p526 = pneg %p281
        %p527 = pneg %p278
        %p528 = pneg %p309
        %p529 = pneg %p306
        %s530 = smul.u32 2, %s33
        %p531 = scmp.lt.s32.totalorder %s32, 1
        %s532 = scalar_select %p531, %s32, 1
        %p533 = scmp.lt.s32.totalorder %s530, 1
        %s534 = scalar_select %p533, %s530, 1
        %s535 = smul.addr %s532, 2
        %s536 = sadd.s32 %s534, %s535
        %s537 = smul.addr %s536, 4
        %s538 = scalar_lea.vmem %s10, %s537
        %s539 = ssub.s32 1, %s32
        %s540 = smul.u32 %s33, %s539
        %s541 = smul.u32 2, %s540
        %p542 = scmp.lt.s32.totalorder %s541, 1
        %s543 = scalar_select %p542, %s541, 1
        %s544 = smul.addr %s543, 4
        %s545 = scalar_lea.vmem %s0, %s544
        %s546 = ssub.s32 1, %s32
        %s547 = smul.u32 %s33, %s546
        %s548 = smul.u32 2, %s547
        %s549 = smul.u32 %s33, %s32
        %s550 = smul.u32 2, %s549
        %p551 = scmp.lt.s32.totalorder %s550, 1
        %s552 = scalar_select %p551, %s550, 1
        %s553 = smul.addr %s552, 4
        %s554 = scalar_lea.vmem %s1, %s553
        %s555 = smul.u32 %s33, %s32
        %s556 = smul.u32 2, %s555
        %p557 = scmp.lt.s32.totalorder %s32, 1
        %s558 = scalar_select %p557, %s32, 1
        %s559 = scalar_lea.vmem %s3, %s558
        %p560 = scmp.lt.s32.totalorder %s32, 1
        %s561 = scalar_select %p560, %s32, 1
        %s562 = scalar_lea.vmem %s5, %s561
        %s563 = smul.u32 2, %s33
        %p564 = scmp.lt.s32.totalorder %s32, 1
        %s565 = scalar_select %p564, %s32, 1
        %p566 = scmp.lt.s32.totalorder %s563, 1
        %s567 = scalar_select %p566, %s563, 1
        %s568 = smul.addr %s565, 2
        %s569 = sadd.s32 %s567, %s568
        %s570 = smul.addr %s569, 4
        %s571 = scalar_lea.vmem %s10, %s570
        %s572 = smul.u32 2, %s33
        %p573 = scmp.eq.s32.totalorder %s32, 0
        // Predicated region
        $region77: #{blp_forward_pallas.1} parent=59 // pred_check
          %p574 = pneg %p573
        $region78: #{blp_forward_pallas.1} parent=59 // pred_check_branch
          %576 = sbr.rel (%p574) target = $region80
        $region79: #{blp_forward_pallas.1} parent=59 // pred_region
          %v577 = vld [vmem:[%s545] sm:$0xf]
          %v578 = vld [vmem:[%s545 + $0x4] sm:$0xf]
          %v579 = vld [vmem:[%s453] sm:$0xf]
          %v580 = vld [vmem:[%s453 + $0x4] sm:$0xf]
          %v581 = vld [vmem:[%s453 + $0x8] sm:$0xf]
          %v582 = vld [vmem:[%s453 + $0xc] sm:$0xf]
          %v583 = vld [vmem:[%s453 + $0x10] sm:$0xf]
          %v584 = vld [vmem:[%s453 + $0x14] sm:$0xf]
          %v585 = vld [vmem:[%s453 + $0x18] sm:$0xf]
          %v586 = vld [vmem:[%s453 + $0x1c] sm:$0xf]
          %v587 = vld [vmem:[%s453 + $0x20] sm:$0xf]
          %v588 = vld [vmem:[%s453 + $0x24] sm:$0xf]
          %v589 = vld [vmem:[%s453 + $0x28] sm:$0xf]
          %v590 = vld [vmem:[%s453 + $0x2c] sm:$0xf]
          %v591 = vld [vmem:[%s453 + $0x30] sm:$0xf]
          %v592 = vld [vmem:[%s453 + $0x34] sm:$0xf]
          %v593 = vld [vmem:[%s453 + $0x38] sm:$0xf]
          %v594 = vld [vmem:[%s453 + $0x3c] sm:$0xf]
          %v595 = vld [vmem:[%s559] sm:$0x1]
          %v597 = vperm.slane %v595, 0
          %v601 = vunpack.c.l.b16 %v577
          %v602 = vunpack.c.l.b16 %v578
          %v603 = vpack.c.b16 %v602, %v601
          %v621 = vunpack.c.l.b16 %v579
          %v622 = vunpack.c.l.b16 %v580
          %v623 = vunpack.c.l.b16 %v581
          %v624 = vunpack.c.l.b16 %v582
          %v625 = vunpack.c.l.b16 %v583
          %v626 = vunpack.c.l.b16 %v584
          %v627 = vunpack.c.l.b16 %v585
          %v628 = vunpack.c.l.b16 %v586
          %v629 = vunpack.c.l.b16 %v587
          %v630 = vunpack.c.l.b16 %v588
          %v631 = vunpack.c.l.b16 %v589
          %v632 = vunpack.c.l.b16 %v590
          %v633 = vunpack.c.l.b16 %v591
          %v634 = vunpack.c.l.b16 %v592
          %v635 = vunpack.c.l.b16 %v593
          %v636 = vunpack.c.l.b16 %v594
          %v637 = vpack.c.b16 %v622, %v621
          %v638 = vpack.c.b16 %v624, %v623
          %v639 = vpack.c.b16 %v626, %v625
          %v640 = vpack.c.b16 %v628, %v627
          %v641 = vpack.c.b16 %v630, %v629
          %v642 = vpack.c.b16 %v632, %v631
          %v643 = vpack.c.b16 %v634, %v633
          %v644 = vpack.c.b16 %v636, %v635
          %653 = vmatpush.bf16.msra.mxu0 %v644
          %654 = vmatpush.bf16.msra.mxu0 %v643
          %655 = vmatpush.bf16.msra.mxu0 %v642
          %656 = vmatpush.bf16.msra.mxu0 %v641
          %657 = vmatpush.bf16.msra.mxu0 %v640
          %658 = vmatpush.bf16.msra.mxu0 %v639
          %659 = vmatpush.bf16.msra.mxu0 %v638
          %660 = vmatpush.bf16.msra.mxu0 %v637
          %661 = vmatmul.bf16.gmra.mxu0 %v603
          %v662 = vpop.f32.mrf.mxu0
          %v663 = vadd.f32 %v597, %v662
          %v664 = vpop.f32.mrf.mxu0
          %v665 = vadd.f32 %v597, %v664
          %666 = vdwg.mxu0
          %v667 = vmax.f32 %v663, 0.0
          %v668 = vmax.f32 %v665, 0.0
          %v669 = vpack.c.bf16 %v668, %v667
          %v670 = vld [vmem:[%s463] sm:$0xf]
          %v671 = vld [vmem:[%s463 + $0x4] sm:$0xf]
          %v672 = vld [vmem:[%s463 + $0x8] sm:$0xf]
          %v673 = vld [vmem:[%s463 + $0xc] sm:$0xf]
          %v674 = vld [vmem:[%s463 + $0x10] sm:$0xf]
          %v675 = vld [vmem:[%s463 + $0x14] sm:$0xf]
          %v676 = vld [vmem:[%s463 + $0x18] sm:$0xf]
          %v677 = vld [vmem:[%s463 + $0x1c] sm:$0xf]
          %v678 = vld [vmem:[%s463 + $0x20] sm:$0xf]
          %v679 = vld [vmem:[%s463 + $0x24] sm:$0xf]
          %v680 = vld [vmem:[%s463 + $0x28] sm:$0xf]
          %v681 = vld [vmem:[%s463 + $0x2c] sm:$0xf]
          %v682 = vld [vmem:[%s463 + $0x30] sm:$0xf]
          %v683 = vld [vmem:[%s463 + $0x34] sm:$0xf]
          %v684 = vld [vmem:[%s463 + $0x38] sm:$0xf]
          %v685 = vld [vmem:[%s463 + $0x3c] sm:$0xf]
          %v686 = vld [vmem:[%s562] sm:$0x1]
          %v688 = vperm.slane %v686, 0
          %v706 = vunpack.c.l.b16 %v670
          %v707 = vunpack.c.l.b16 %v671
          %v708 = vunpack.c.l.b16 %v672
          %v709 = vunpack.c.l.b16 %v673
          %v710 = vunpack.c.l.b16 %v674
          %v711 = vunpack.c.l.b16 %v675
          %v712 = vunpack.c.l.b16 %v676
          %v713 = vunpack.c.l.b16 %v677
          %v714 = vunpack.c.l.b16 %v678
          %v715 = vunpack.c.l.b16 %v679
          %v716 = vunpack.c.l.b16 %v680
          %v717 = vunpack.c.l.b16 %v681
          %v718 = vunpack.c.l.b16 %v682
          %v719 = vunpack.c.l.b16 %v683
          %v720 = vunpack.c.l.b16 %v684
          %v721 = vunpack.c.l.b16 %v685
          %v722 = vpack.c.b16 %v707, %v706
          %v723 = vpack.c.b16 %v709, %v708
          %v724 = vpack.c.b16 %v711, %v710
          %v725 = vpack.c.b16 %v713, %v712
          %v726 = vpack.c.b16 %v715, %v714
          %v727 = vpack.c.b16 %v717, %v716
          %v728 = vpack.c.b16 %v719, %v718
          %v729 = vpack.c.b16 %v721, %v720
          %738 = vmatpush.bf16.msra.mxu0 %v729
          %739 = vmatpush.bf16.msra.mxu0 %v728
          %740 = vmatpush.bf16.msra.mxu0 %v727
          %741 = vmatpush.bf16.msra.mxu0 %v726
          %742 = vmatpush.bf16.msra.mxu0 %v725
          %743 = vmatpush.bf16.msra.mxu0 %v724
          %744 = vmatpush.bf16.msra.mxu0 %v723
          %745 = vmatpush.bf16.msra.mxu0 %v722
          %746 = vmatmul.bf16.gmra.mxu0 %v669
          %v747 = vpop.f32.mrf.mxu0
          %v748 = vadd.f32 %v688, %v747
          %v749 = vpop.f32.mrf.mxu0
          %v750 = vadd.f32 %v688, %v749
          %751 = vdwg.mxu0
          %v752 = vpack.c.bf16 %v750, %v748
          %v753 = vld [vmem:[#allocation6] sm:$0xf]
          %v754 = vld [vmem:[#allocation6 + $0x4] sm:$0xf]
          %v755 = vld [vmem:[#allocation6 + $0x8] sm:$0xf]
          %v756 = vld [vmem:[#allocation6 + $0xc] sm:$0xf]
          %v757 = vld [vmem:[#allocation6 + $0x10] sm:$0xf]
          %v758 = vld [vmem:[#allocation6 + $0x14] sm:$0xf]
          %v759 = vld [vmem:[#allocation6 + $0x18] sm:$0xf]
          %v760 = vld [vmem:[#allocation6 + $0x1c] sm:$0xf]
          %v761 = vld [vmem:[#allocation6 + $0x20] sm:$0xf]
          %v762 = vld [vmem:[#allocation6 + $0x24] sm:$0xf]
          %v763 = vld [vmem:[#allocation6 + $0x28] sm:$0xf]
          %v764 = vld [vmem:[#allocation6 + $0x2c] sm:$0xf]
          %v765 = vld [vmem:[#allocation6 + $0x30] sm:$0xf]
          %v766 = vld [vmem:[#allocation6 + $0x34] sm:$0xf]
          %v767 = vld [vmem:[#allocation6 + $0x38] sm:$0xf]
          %v768 = vld [vmem:[#allocation6 + $0x3c] sm:$0xf]
          %v769 = vld [vmem:[%s7] sm:$0x1]
          %v771 = vperm.slane %v769, 0
          %v789 = vunpack.c.l.b16 %v753
          %v790 = vunpack.c.l.b16 %v754
          %v791 = vunpack.c.l.b16 %v755
          %v792 = vunpack.c.l.b16 %v756
          %v793 = vunpack.c.l.b16 %v757
          %v794 = vunpack.c.l.b16 %v758
          %v795 = vunpack.c.l.b16 %v759
          %v796 = vunpack.c.l.b16 %v760
          %v797 = vunpack.c.l.b16 %v761
          %v798 = vunpack.c.l.b16 %v762
          %v799 = vunpack.c.l.b16 %v763
          %v800 = vunpack.c.l.b16 %v764
          %v801 = vunpack.c.l.b16 %v765
          %v802 = vunpack.c.l.b16 %v766
          %v803 = vunpack.c.l.b16 %v767
          %v804 = vunpack.c.l.b16 %v768
          %v805 = vpack.c.b16 %v790, %v789
          %v806 = vpack.c.b16 %v792, %v791
          %v807 = vpack.c.b16 %v794, %v793
          %v808 = vpack.c.b16 %v796, %v795
          %v809 = vpack.c.b16 %v798, %v797
          %v810 = vpack.c.b16 %v800, %v799
          %v811 = vpack.c.b16 %v802, %v801
          %v812 = vpack.c.b16 %v804, %v803
          %821 = vmatpush.bf16.msra.mxu0 %v812
          %822 = vmatpush.bf16.msra.mxu0 %v811
          %823 = vmatpush.bf16.msra.mxu0 %v810
          %824 = vmatpush.bf16.msra.mxu0 %v809
          %825 = vmatpush.bf16.msra.mxu0 %v808
          %826 = vmatpush.bf16.msra.mxu0 %v807
          %827 = vmatpush.bf16.msra.mxu0 %v806
          %828 = vmatpush.bf16.msra.mxu0 %v805
          %829 = vmatmul.bf16.gmra.mxu0 %v752
          %v830 = vpop.f32.mrf.mxu0
          %v831 = vadd.f32 %v771, %v830
          %v832 = vpop.f32.mrf.mxu0
          %v833 = vadd.f32 %v771, %v832
          %834 = vdwg.mxu0
          %v835 = vmax.f32 %v831, 0.0
          %v836 = vmax.f32 %v833, 0.0
          %v837 = vpack.c.bf16 %v836, %v835
          %v838 = vld [vmem:[#allocation7] sm:$0xf]
          %v839 = vld [vmem:[#allocation7 + $0x4] sm:$0xf]
          %v840 = vld [vmem:[#allocation7 + $0x8] sm:$0xf]
          %v841 = vld [vmem:[#allocation7 + $0xc] sm:$0xf]
          %v842 = vld [vmem:[#allocation7 + $0x10] sm:$0xf]
          %v843 = vld [vmem:[#allocation7 + $0x14] sm:$0xf]
          %v844 = vld [vmem:[#allocation7 + $0x18] sm:$0xf]
          %v845 = vld [vmem:[#allocation7 + $0x1c] sm:$0xf]
          %v846 = vld [vmem:[#allocation7 + $0x20] sm:$0xf]
          %v847 = vld [vmem:[#allocation7 + $0x24] sm:$0xf]
          %v848 = vld [vmem:[#allocation7 + $0x28] sm:$0xf]
          %v849 = vld [vmem:[#allocation7 + $0x2c] sm:$0xf]
          %v850 = vld [vmem:[#allocation7 + $0x30] sm:$0xf]
          %v851 = vld [vmem:[#allocation7 + $0x34] sm:$0xf]
          %v852 = vld [vmem:[#allocation7 + $0x38] sm:$0xf]
          %v853 = vld [vmem:[#allocation7 + $0x3c] sm:$0xf]
          %v854 = vld [vmem:[%s9] sm:$0x1]
          %v856 = vperm.slane %v854, 0
          %v874 = vunpack.c.l.b16 %v838
          %v875 = vunpack.c.l.b16 %v839
          %v876 = vunpack.c.l.b16 %v840
          %v877 = vunpack.c.l.b16 %v841
          %v878 = vunpack.c.l.b16 %v842
          %v879 = vunpack.c.l.b16 %v843
          %v880 = vunpack.c.l.b16 %v844
          %v881 = vunpack.c.l.b16 %v845
          %v882 = vunpack.c.l.b16 %v846
          %v883 = vunpack.c.l.b16 %v847
          %v884 = vunpack.c.l.b16 %v848
          %v885 = vunpack.c.l.b16 %v849
          %v886 = vunpack.c.l.b16 %v850
          %v887 = vunpack.c.l.b16 %v851
          %v888 = vunpack.c.l.b16 %v852
          %v889 = vunpack.c.l.b16 %v853
          %v890 = vpack.c.b16 %v875, %v874
          %v891 = vpack.c.b16 %v877, %v876
          %v892 = vpack.c.b16 %v879, %v878
          %v893 = vpack.c.b16 %v881, %v880
          %v894 = vpack.c.b16 %v883, %v882
          %v895 = vpack.c.b16 %v885, %v884
          %v896 = vpack.c.b16 %v887, %v886
          %v897 = vpack.c.b16 %v889, %v888
          %906 = vmatpush.bf16.msra.mxu0 %v897
          %907 = vmatpush.bf16.msra.mxu0 %v896
          %908 = vmatpush.bf16.msra.mxu0 %v895
          %909 = vmatpush.bf16.msra.mxu0 %v894
          %910 = vmatpush.bf16.msra.mxu0 %v893
          %911 = vmatpush.bf16.msra.mxu0 %v892
          %912 = vmatpush.bf16.msra.mxu0 %v891
          %913 = vmatpush.bf16.msra.mxu0 %v890
          %914 = vmatmul.bf16.gmra.mxu0 %v837
          %v915 = vpop.f32.mrf.mxu0
          %v916 = vadd.f32 %v856, %v915
          %v917 = vpop.f32.mrf.mxu0
          %v918 = vadd.f32 %v856, %v917
          %919 = vdwg.mxu0
          %v920 = vpack.c.bf16 %v916, %v916
          %v921 = vpack.c.bf16 %v918, %v918
          %922 = vst [vmem:[%s571] sm:$0xf] %v920
          %923 = vst [vmem:[%s571 + $0x4] sm:$0xf] %v921
        $region80: #{blp_forward_pallas.1} parent=59 // pred_fallthru
          _
        %p924 = scmp.ne.s32.totalorder %s32, 0
        // Predicated region
        $region81: #{blp_forward_pallas.1} parent=59 // pred_check
          %p925 = pneg %p924
        $region82: #{blp_forward_pallas.1} parent=59 // pred_check_branch
          %927 = sbr.rel (%p925) target = $region84
        $region83: #{blp_forward_pallas.1} parent=59 // pred_region
          %v928 = vld [vmem:[%s554] sm:$0xf]
          %v929 = vld [vmem:[%s554 + $0x4] sm:$0xf]
          %v930 = vld [vmem:[%s453] sm:$0xf]
          %v931 = vld [vmem:[%s453 + $0x4] sm:$0xf]
          %v932 = vld [vmem:[%s453 + $0x8] sm:$0xf]
          %v933 = vld [vmem:[%s453 + $0xc] sm:$0xf]
          %v934 = vld [vmem:[%s453 + $0x10] sm:$0xf]
          %v935 = vld [vmem:[%s453 + $0x14] sm:$0xf]
          %v936 = vld [vmem:[%s453 + $0x18] sm:$0xf]
          %v937 = vld [vmem:[%s453 + $0x1c] sm:$0xf]
          %v938 = vld [vmem:[%s453 + $0x20] sm:$0xf]
          %v939 = vld [vmem:[%s453 + $0x24] sm:$0xf]
          %v940 = vld [vmem:[%s453 + $0x28] sm:$0xf]
          %v941 = vld [vmem:[%s453 + $0x2c] sm:$0xf]
          %v942 = vld [vmem:[%s453 + $0x30] sm:$0xf]
          %v943 = vld [vmem:[%s453 + $0x34] sm:$0xf]
          %v944 = vld [vmem:[%s453 + $0x38] sm:$0xf]
          %v945 = vld [vmem:[%s453 + $0x3c] sm:$0xf]
          %v946 = vld [vmem:[%s559] sm:$0x1]
          %v948 = vperm.slane %v946, 0
          %v952 = vunpack.c.l.b16 %v928
          %v953 = vunpack.c.l.b16 %v929
          %v954 = vpack.c.b16 %v953, %v952
          %v972 = vunpack.c.l.b16 %v930
          %v973 = vunpack.c.l.b16 %v931
          %v974 = vunpack.c.l.b16 %v932
          %v975 = vunpack.c.l.b16 %v933
          %v976 = vunpack.c.l.b16 %v934
          %v977 = vunpack.c.l.b16 %v935
          %v978 = vunpack.c.l.b16 %v936
          %v979 = vunpack.c.l.b16 %v937
          %v980 = vunpack.c.l.b16 %v938
          %v981 = vunpack.c.l.b16 %v939
          %v982 = vunpack.c.l.b16 %v940
          %v983 = vunpack.c.l.b16 %v941
          %v984 = vunpack.c.l.b16 %v942
          %v985 = vunpack.c.l.b16 %v943
          %v986 = vunpack.c.l.b16 %v944
          %v987 = vunpack.c.l.b16 %v945
          %v988 = vpack.c.b16 %v973, %v972
          %v989 = vpack.c.b16 %v975, %v974
          %v990 = vpack.c.b16 %v977, %v976
          %v991 = vpack.c.b16 %v979, %v978
          %v992 = vpack.c.b16 %v981, %v980
          %v993 = vpack.c.b16 %v983, %v982
          %v994 = vpack.c.b16 %v985, %v984
          %v995 = vpack.c.b16 %v987, %v986
          %1004 = vmatpush.bf16.msra.mxu0 %v995
          %1005 = vmatpush.bf16.msra.mxu0 %v994
          %1006 = vmatpush.bf16.msra.mxu0 %v993
          %1007 = vmatpush.bf16.msra.mxu0 %v992
          %1008 = vmatpush.bf16.msra.mxu0 %v991
          %1009 = vmatpush.bf16.msra.mxu0 %v990
          %1010 = vmatpush.bf16.msra.mxu0 %v989
          %1011 = vmatpush.bf16.msra.mxu0 %v988
          %1012 = vmatmul.bf16.gmra.mxu0 %v954
          %v1013 = vpop.f32.mrf.mxu0
          %v1014 = vadd.f32 %v948, %v1013
          %v1015 = vpop.f32.mrf.mxu0
          %v1016 = vadd.f32 %v948, %v1015
          %1017 = vdwg.mxu0
          %v1018 = vmax.f32 %v1014, 0.0
          %v1019 = vmax.f32 %v1016, 0.0
          %v1020 = vpack.c.bf16 %v1019, %v1018
          %v1021 = vld [vmem:[%s463] sm:$0xf]
          %v1022 = vld [vmem:[%s463 + $0x4] sm:$0xf]
          %v1023 = vld [vmem:[%s463 + $0x8] sm:$0xf]
          %v1024 = vld [vmem:[%s463 + $0xc] sm:$0xf]
          %v1025 = vld [vmem:[%s463 + $0x10] sm:$0xf]
          %v1026 = vld [vmem:[%s463 + $0x14] sm:$0xf]
          %v1027 = vld [vmem:[%s463 + $0x18] sm:$0xf]
          %v1028 = vld [vmem:[%s463 + $0x1c] sm:$0xf]
          %v1029 = vld [vmem:[%s463 + $0x20] sm:$0xf]
          %v1030 = vld [vmem:[%s463 + $0x24] sm:$0xf]
          %v1031 = vld [vmem:[%s463 + $0x28] sm:$0xf]
          %v1032 = vld [vmem:[%s463 + $0x2c] sm:$0xf]
          %v1033 = vld [vmem:[%s463 + $0x30] sm:$0xf]
          %v1034 = vld [vmem:[%s463 + $0x34] sm:$0xf]
          %v1035 = vld [vmem:[%s463 + $0x38] sm:$0xf]
          %v1036 = vld [vmem:[%s463 + $0x3c] sm:$0xf]
          %v1037 = vld [vmem:[%s562] sm:$0x1]
          %v1039 = vperm.slane %v1037, 0
          %v1057 = vunpack.c.l.b16 %v1021
          %v1058 = vunpack.c.l.b16 %v1022
          %v1059 = vunpack.c.l.b16 %v1023
          %v1060 = vunpack.c.l.b16 %v1024
          %v1061 = vunpack.c.l.b16 %v1025
          %v1062 = vunpack.c.l.b16 %v1026
          %v1063 = vunpack.c.l.b16 %v1027
          %v1064 = vunpack.c.l.b16 %v1028
          %v1065 = vunpack.c.l.b16 %v1029
          %v1066 = vunpack.c.l.b16 %v1030
          %v1067 = vunpack.c.l.b16 %v1031
          %v1068 = vunpack.c.l.b16 %v1032
          %v1069 = vunpack.c.l.b16 %v1033
          %v1070 = vunpack.c.l.b16 %v1034
          %v1071 = vunpack.c.l.b16 %v1035
          %v1072 = vunpack.c.l.b16 %v1036
          %v1073 = vpack.c.b16 %v1058, %v1057
          %v1074 = vpack.c.b16 %v1060, %v1059
          %v1075 = vpack.c.b16 %v1062, %v1061
          %v1076 = vpack.c.b16 %v1064, %v1063
          %v1077 = vpack.c.b16 %v1066, %v1065
          %v1078 = vpack.c.b16 %v1068, %v1067
          %v1079 = vpack.c.b16 %v1070, %v1069
          %v1080 = vpack.c.b16 %v1072, %v1071
          %1089 = vmatpush.bf16.msra.mxu0 %v1080
          %1090 = vmatpush.bf16.msra.mxu0 %v1079
          %1091 = vmatpush.bf16.msra.mxu0 %v1078
          %1092 = vmatpush.bf16.msra.mxu0 %v1077
          %1093 = vmatpush.bf16.msra.mxu0 %v1076
          %1094 = vmatpush.bf16.msra.mxu0 %v1075
          %1095 = vmatpush.bf16.msra.mxu0 %v1074
          %1096 = vmatpush.bf16.msra.mxu0 %v1073
          %1097 = vmatmul.bf16.gmra.mxu0 %v1020
          %v1098 = vpop.f32.mrf.mxu0
          %v1099 = vadd.f32 %v1039, %v1098
          %v1100 = vpop.f32.mrf.mxu0
          %v1101 = vadd.f32 %v1039, %v1100
          %1102 = vdwg.mxu0
          %v1103 = vpack.c.bf16 %v1099, %v1099
          %v1104 = vpack.c.bf16 %v1101, %v1101
          %1105 = vst [vmem:[%s571] sm:$0xf] %v1103
          %1106 = vst [vmem:[%s571 + $0x4] sm:$0xf] %v1104
        $region84: #{blp_forward_pallas.1} parent=59 // pred_fallthru
          _
        %s1107 = smul.u32 2, %s33
        %p1108 = scmp.lt.s32.totalorder %s32, 1
        %s1109 = scalar_select %p1108, %s32, 1
        %p1110 = scmp.lt.s32.totalorder %s1107, 1
        %s1111 = scalar_select %p1110, %s1107, 1
        %s1112 = smul.addr %s1109, 2
        %s1113 = sadd.s32 %s1111, %s1112
        %s1114 = smul.addr %s1113, 4
        %s1115 = scalar_lea.vmem %s10, %s1114
        // Predicated region
        $region85: #{blp_forward_pallas.1} parent=59 // pred_check
          %p1116 = pneg %p306
        $region86: #{blp_forward_pallas.1} parent=59 // pred_check_branch
          %1118 = sbr.rel (%p1116) target = $region88
        $region87: #{blp_forward_pallas.1} parent=59 // pred_region
          %s1119 = smul.u32 2, %s33
        $region88: #{blp_forward_pallas.1} parent=59 // pred_fallthru
          _
      $region60: #{blp_forward_pallas.1} parent=5 // pred_fallthru
        _
      %p1120 = scmp.le.s32.totalorder 2, %s23
      // Predicated region
      $region89: #{blp_forward_pallas.1} parent=5 // pred_check
        %p1121 = pneg %p1120
      $region90: #{blp_forward_pallas.1} parent=5 // pred_check_branch
        %1123 = sbr.rel (%p1121) target = $region92
      $region91: #{blp_forward_pallas.1} parent=5 // pred_region
        %s1124 = ssub.s32 %s23, 2
        // Predicated region
        $region93: #{blp_forward_pallas.1} parent=91 // pred_check
          %p1125 = pneg %p312
        $region94: #{blp_forward_pallas.1} parent=91 // pred_check_branch
          %1127 = sbr.rel (%p1125) target = $region96
        $region95: #{blp_forward_pallas.1} parent=91 // pred_region
          %s1128 = smul.u32 2, %s35
          %p1129 = scmp.lt.s32.totalorder %s34, 1
          %s1130 = scalar_select %p1129, %s34, 1
          %p1131 = scmp.lt.s32.totalorder %s1128, 1
          %s1132 = scalar_select %p1131, %s1128, 1
          %s1133 = smul.addr %s1130, 2
          %s1134 = sadd.s32 %s1132, %s1133
          %s1135 = smul.addr %s1134, 4
          %s1136 = scalar_lea.vmem %s10, %s1135
        $region96: #{blp_forward_pallas.1} parent=91 // pred_fallthru
          _
      $region92: #{blp_forward_pallas.1} parent=5 // pred_fallthru
        _
    $region6: #{blp_forward_pallas.1} parent=1 // loop_footer
      %s27 = sadd.s32 1, %s23
    $region7: #{blp_forward_pallas.1} parent=1 // loop_footer_branch
      %22 = sbr.rel target = $region3
    $region8: #{blp_forward_pallas.1} parent=1 // loop_exit
      _
    %1137 = vsyncpa [#allocation3], 1
    %s1138 = scalar_lea.sflag [#allocation3], 1
    %1139 = vsyncpa %s1138, 1
    %1140 = vsyncpa [#allocation5], 1
    %s1141 = scalar_lea.sflag [#allocation5], 1
    %1142 = vsyncpa %s1141, 1
    %1143 = vsyncpa [#allocation8], 1

</llo_original>
